<compile_context>
chip_gen: v7x
topology: tpu7x:2x2x1
jax: 0.10.0
libtpu: 0.0.40
codegen_flags: <defaults>
</compile_context>

<pallas_src>
import functools

import jax
import jax.numpy as jnp
from jax.experimental import pallas as pl
from jax.experimental.pallas import tpu as pltpu


def _l2_normalize(x):
    """torch.nn.functional.normalize(x, dim=-1) (eps = 1e-12)."""
    ss = jnp.sum(x * x, axis=-1, keepdims=True)
    return x * jax.lax.rsqrt(jnp.maximum(ss, 1e-24))


def _choose_classes_per_block(num_id, group, target_rows=64):
    """How many classes each grid step handles.

    cpb must divide num_id (exact grid) and cpb*group % 8 == 0 keeps the preds
    row block and the gallery positive-slice sublane aligned.  Falls back to
    the whole batch (full-dim block, always legal) if no aligned divisor.
    """
    divisors = [c for c in range(1, num_id + 1) if num_id % c == 0]
    aligned = [c for c in divisors if (c * group) % 8 == 0]
    if not aligned:
        return num_id
    small = [c for c in aligned if c * group <= target_rows]
    return max(small) if small else min(aligned)


def _choose_gallery_chunk(G, rows, group, budget_bytes):
    """Largest sublane-aligned divisor of G whose (rows,group,chunk) f32 cube fits."""
    max_cols = max(8, budget_bytes // (4 * rows * group))
    if G <= max_cols:
        return G
    best = None
    for c in range(8, int(max_cols) + 1, 8):
        if G % c == 0:
            best = c
    return best if best is not None else G


def _smooth_ap_cross_kernel(preds_ref, gal_ref, out_ref, *, group, chunk):
    f32 = jnp.float32
    s = pl.program_id(0)
    rows, D = preds_ref.shape          # rows = classes_per_block * group
    G = gal_ref.shape[0]
    cpb = rows // group
    n_chunks = G // chunk

    # preds block: already L2-normalised and scaled by 1/(2*anneal) in wrapper.
    p_blk = preds_ref[...]                                         # (rows, D)

    # Positive-set gallery rows for this block's classes (sublane-aligned).
    row_start = s * rows
    if rows % 8 == 0:
        row_start = pl.multiple_of(row_start, 8)
    gal_pos = gal_ref[pl.ds(row_start, rows), :]                   # (rows, D)

    # --- pos_sims[a, j] = <p_a, gal[class_start(a)+j]> (already temperature
    # scaled): one tiny batched MXU matmul, replaces the masked extraction. ---
    p3 = p_blk.reshape(cpb, group, D)
    g3 = gal_pos.reshape(cpb, group, D)
    pos3 = jnp.einsum('tad,tbd->tab', p3, g3,
                      preferred_element_type=f32)                  # (cpb, g, g)
    pos_sims = pos3.reshape(rows, group)                           # (rows, g)

    # --- rank within the positive set: (rows, g, g) tanh block ---------------
    # sigmoid(t/anneal) = 0.5*(1 + tanh(t/(2*anneal))); scale already folded in.
    rank_pos = 0.5 * (f32(group) + jnp.sum(
        jnp.tanh(pos_sims[:, None, :] - pos_sims[:, :, None]), axis=-1))

    # --- rank over the whole gallery, chunked so the (rows, g, chunk) f32
    # intermediate stays inside the VMEM budget --------------------------------
    def _chunk_tanh_sum(gal_chunk):
        sim_chunk = jax.lax.dot_general(
            p_blk, gal_chunk, (((1,), (1,)), ((), ())),
            preferred_element_type=f32)                            # (rows, Gc)
        return jnp.sum(jnp.tanh(sim_chunk[:, None, :] - pos_sims[:, :, None]),
                       axis=-1)                                    # (rows, g)

    if n_chunks == 1:
        tanh_all = _chunk_tanh_sum(gal_ref[...])
    else:
        def body(i, acc):
            c0 = pl.multiple_of(i * chunk, 8)                      # chunk % 8 == 0
            return acc + _chunk_tanh_sum(gal_ref[pl.ds(c0, chunk), :])
        tanh_all = jax.lax.fori_loop(0, n_chunks, body,
                                     jnp.zeros((rows, group), f32))
    rank_all = 0.5 * (f32(G) + tanh_all)                           # (rows, g)

    # --- per-block AP contribution -------------------------------------------
    ratio = rank_pos * pl.reciprocal(rank_all, approx=True)
    part = jnp.sum(jnp.sum(ratio, axis=-1, keepdims=True), axis=0, keepdims=True)
    out_ref[...] = jnp.broadcast_to(part.reshape(1, 1, 1), out_ref.shape)


def smooth_ap_cross(preds, gallery, *, anneal, batch_size, num_id,
                    rank_chunk_budget_bytes=6 << 20):
    """Pallas implementation of SmoothAP_Cross.forward (returns shape (1,))."""
    B, D = preds.shape
    G, Dg = gallery.shape
    assert B == batch_size and Dg == D
    assert batch_size % num_id == 0
    # gallery.view(num_id, batch_size//num_id, feat_dims) in the torch module
    # requires the gallery to be exactly one batch worth of items, same order.
    assert G == batch_size, "SmoothAP_Cross requires gallery_size == batch_size"
    group = batch_size // num_id

    # Hoisted out of the per-block grid loop: normalise once, fold the sigmoid
    # temperature into the preds operand (matmuls then produce scaled sims).
    inv_2a = 0.5 / float(anneal)
    preds_n = _l2_normalize(preds.astype(jnp.float32)) * jnp.float32(inv_2a)
    gal_n = _l2_normalize(gallery.astype(jnp.float32))

    cpb = _choose_classes_per_block(num_id, group)
    rows = cpb * group
    n_blocks = num_id // cpb
    chunk = _choose_gallery_chunk(G, rows, group, rank_chunk_budget_bytes)

    # VMEM limit from actual tile sizes (double-buffered inputs + largest fused
    # intermediates), clamped below v7x's 64 MiB physical VMEM.
    est = 4 * (2 * G * D + 2 * rows * D + rows * group * chunk
               + rows * group * group + rows * chunk + 4 * rows * group)
    vmem_limit = int(min(max(2 * est, 32 << 20), 56 << 20))

    kernel = functools.partial(_smooth_ap_cross_kernel, group=group, chunk=chunk)

    partials = pl.pallas_call(
        kernel,
        out_shape=jax.ShapeDtypeStruct((n_blocks, 8, 128), jnp.float32),
        grid=(n_blocks,),
        in_specs=[
            pl.BlockSpec((rows, D), lambda s: (s, 0)),   # this block's preds rows
            pl.BlockSpec((G, D), lambda s: (0, 0)),      # full gallery, resident
        ],
        # one aligned (8,128) tile per block; the partial sum is broadcast into
        # it and read back at [:, 0, 0] in the epilogue.
        out_specs=pl.BlockSpec((1, 8, 128), lambda s: (s, 0, 0)),
        compiler_params=pltpu.CompilerParams(
            dimension_semantics=("parallel",),           # blocks split over TCs (v7x)
            vmem_limit_bytes=vmem_limit,
        ),
    )(preds_n, gal_n)

    # Tiny epilogue in plain JAX so the block grid axis can stay "parallel".
    ap = jnp.sum(partials[:, 0, 0]) / (group * batch_size)
    return jnp.reshape(1.0 - ap, (1,))


# ---------------------- pure-JAX reference (for checking) ----------------------
def smooth_ap_cross_ref(preds, gallery, *, anneal, batch_size, num_id):
    """Direct transliteration of the torch module."""
    G, D = gallery.shape
    group = batch_size // num_id

    def tsig(t):
        return 1.0 / (1.0 + jnp.exp(jnp.clip(-t / anneal, -50.0, 50.0)))

    def norm(x):
        n = jnp.sqrt(jnp.sum(x * x, axis=1, keepdims=True))
        return x / jnp.maximum(n, 1e-12)

    p = norm(preds)
    g = norm(gallery)
    sim_all = p @ g.T                                                    # (B, G)
    sim_all_rk = jnp.sum(tsig(sim_all[:, None, :] - sim_all[:, :, None]), -1)
    xs = p.reshape(num_id, group, D)
    gp = g.reshape(num_id, group, D)
    sim_pos = jnp.einsum("cad,cbd->cab", xs, gp)
    sim_pos_rk = jnp.sum(tsig(sim_pos[:, :, None, :] - sim_pos[:, :, :, None]), -1)
    ap = 0.0
    for c in range(num_id):
        blk = sim_all_rk[c * group:(c + 1) * group, c * group:(c + 1) * group]
        ap = ap + jnp.sum(sim_pos_rk[c] / blk) / group / batch_size
    return jnp.reshape(1.0 - ap, (1,))


if __name__ == "__main__":
    def check(batch_size, num_id, feat_dims, anneal=0.1, seed=0, **kw):
        key = jax.random.PRNGKey(seed)
        k1, k2 = jax.random.split(key, 2)
        preds = jax.random.normal(k1, (batch_size, feat_dims), jnp.float32)
        gallery = jax.random.normal(k2, (batch_size, feat_dims), jnp.float32)
        out = smooth_ap_cross(preds, gallery, anneal=anneal,
                              batch_size=batch_size, num_id=num_id, **kw)
        out = jax.block_until_ready(out)
        ref = smooth_ap_cross_ref(preds, gallery, anneal=anneal,
                                  batch_size=batch_size, num_id=num_id)
        assert out.shape == (1,)
        assert jnp.allclose(out, ref, rtol=5e-3, atol=5e-3), (out, ref)

    # multi-block grid: 12 classes of 8 -> two 48-row blocks
    check(batch_size=96, num_id=12, feat_dims=32)
    # tiny original config (group=4, single 8-row block)
    check(batch_size=8, num_id=2, feat_dims=32)
    # group not sublane-alignable -> whole-batch fallback block
    check(batch_size=12, num_id=3, feat_dims=32, seed=1)
    # force the chunked rank_all fori_loop path with a tiny budget
    check(batch_size=96, num_id=12, feat_dims=32, seed=2,
          rank_chunk_budget_bytes=32 * 1024)

    print("KERNEL_OK")
</pallas_src>

<mosaic_0001>
module attributes {stable_mosaic.version = 11 : i64} {
  func.func @_smooth_ap_cross_kernel(%arg0: i32, %arg1: memref<48x32xf32, #tpu.memory_space<vmem>>, %arg2: memref<96x32xf32, #tpu.memory_space<vmem>>, %arg3: memref<1x8x128xf32, #tpu.memory_space<vmem>>) attributes {dimension_semantics = [#tpu.dimension_semantics<parallel>], iteration_bounds = array<i64: 2>, scalar_prefetch = 0 : i64, scratch_operands = 0 : i64, tpu.core_type = #tpu.core_type<tc>, window_params = [{transform_indices = @transform_0, window_bounds = array<i64: 48, 32>}, {pipeline_mode = #tpu.pipeline_mode<synchronous>, transform_indices = @transform_1, window_bounds = array<i64: 96, 32>}, {transform_indices = @transform_2, window_bounds = array<i64: 1, 8, 128>}]} {
    %c0 = arith.constant 0 : index
    %c0_0 = arith.constant 0 : index
    %0 = vector.load %arg1[%c0, %c0_0] : memref<48x32xf32, #tpu.memory_space<vmem>>, vector<48x32xf32>
    %c48_i32 = arith.constant 48 : i32
    %1 = arith.muli %arg0, %c48_i32 : i32
    %2 = tpu.assume_multiple %1, 8 : i32
    %3 = arith.index_cast %2 : i32 to index
    %c0_1 = arith.constant 0 : index
    %4 = vector.load %arg2[%3, %c0_1] : memref<96x32xf32, #tpu.memory_space<vmem>>, vector<48x32xf32>
    %5 = vector.shape_cast %0 : vector<48x32xf32> to vector<6x8x32xf32>
    %6 = vector.shape_cast %4 : vector<48x32xf32> to vector<6x8x32xf32>
    "tpu.trace_start"() <{level = 10 : i32, message = "tad,tbd->tab"}> : () -> ()
    %cst = arith.constant dense<0.000000e+00> : vector<6x8x8xf32>
    %7 = tpu.matmul %5, %6, %cst {dimension_numbers = #tpu.dot_dimension_numbers<[2], [2], [1], [1], [0, 0, 0, 1, 1, 1], [0], [0]>} : vector<6x8x32xf32>, vector<6x8x32xf32>, vector<6x8x8xf32> -> vector<6x8x8xf32>
    "tpu.trace_stop"() : () -> ()
    %8 = vector.shape_cast %7 : vector<6x8x8xf32> to vector<48x8xf32>
    %9 = vector.shape_cast %8 : vector<48x8xf32> to vector<48x1x8xf32>
    %10 = vector.shape_cast %8 : vector<48x8xf32> to vector<48x8x1xf32>
    %11 = vector.broadcast %9 : vector<48x1x8xf32> to vector<48x8x8xf32>
    %12 = vector.broadcast %10 : vector<48x8x1xf32> to vector<48x8x8xf32>
    %13 = arith.subf %11, %12 : vector<48x8x8xf32>
    %14 = math.tanh %13 : vector<48x8x8xf32>
    %cst_2 = arith.constant dense<0.000000e+00> : vector<48x8xf32>
    %15 = vector.multi_reduction <add>, %14, %cst_2 [2] : vector<48x8x8xf32> to vector<48x8xf32>
    %cst_3 = arith.constant 8.000000e+00 : f32
    %16 = vector.broadcast %cst_3 : f32 to vector<48x8xf32>
    %17 = arith.addf %16, %15 : vector<48x8xf32>
    %cst_4 = arith.constant 5.000000e-01 : f32
    %18 = vector.broadcast %cst_4 : f32 to vector<48x8xf32>
    %19 = arith.mulf %18, %17 : vector<48x8xf32>
    %c0_5 = arith.constant 0 : index
    %c0_6 = arith.constant 0 : index
    %20 = vector.load %arg2[%c0_5, %c0_6] : memref<96x32xf32, #tpu.memory_space<vmem>>, vector<96x32xf32>
    %cst_7 = arith.constant dense<0.000000e+00> : vector<48x96xf32>
    %21 = tpu.matmul %0, %20, %cst_7 {dimension_numbers = #tpu.dot_dimension_numbers<[1], [1], [0], [0], [0, 0, 1, 0], [], []>} : vector<48x32xf32>, vector<96x32xf32>, vector<48x96xf32> -> vector<48x96xf32>
    %22 = vector.shape_cast %21 : vector<48x96xf32> to vector<48x1x96xf32>
    %23 = vector.shape_cast %8 : vector<48x8xf32> to vector<48x8x1xf32>
    %24 = vector.broadcast %22 : vector<48x1x96xf32> to vector<48x8x96xf32>
    %25 = vector.broadcast %23 : vector<48x8x1xf32> to vector<48x8x96xf32>
    %26 = arith.subf %24, %25 : vector<48x8x96xf32>
    %27 = math.tanh %26 : vector<48x8x96xf32>
    %cst_8 = arith.constant dense<0.000000e+00> : vector<48x8xf32>
    %28 = vector.multi_reduction <add>, %27, %cst_8 [2] : vector<48x8x96xf32> to vector<48x8xf32>
    %cst_9 = arith.constant 9.600000e+01 : f32
    %29 = vector.broadcast %cst_9 : f32 to vector<48x8xf32>
    %30 = arith.addf %29, %28 : vector<48x8xf32>
    %cst_10 = arith.constant 5.000000e-01 : f32
    %31 = vector.broadcast %cst_10 : f32 to vector<48x8xf32>
    %32 = arith.mulf %31, %30 : vector<48x8xf32>
    %33 = tpu.reciprocal %32 {approx = true} : vector<48x8xf32> -> vector<48x8xf32>
    %34 = arith.mulf %19, %33 : vector<48x8xf32>
    %cst_11 = arith.constant dense<0.000000e+00> : vector<48xf32>
    %35 = vector.multi_reduction <add>, %34, %cst_11 [1] : vector<48x8xf32> to vector<48xf32>
    %36 = vector.shape_cast %35 : vector<48xf32> to vector<48x1xf32>
    %cst_12 = arith.constant dense<0.000000e+00> : vector<1xf32>
    %37 = vector.multi_reduction <add>, %36, %cst_12 [0] : vector<48x1xf32> to vector<1xf32>
    %38 = vector.shape_cast %37 : vector<1xf32> to vector<1x1xf32>
    %39 = vector.shape_cast %38 : vector<1x1xf32> to vector<1x1x1xf32>
    %40 = vector.shape_cast %39 : vector<1x1x1xf32> to vector<1x1x1xf32>
    %41 = vector.broadcast %40 : vector<1x1x1xf32> to vector<1x8x128xf32>
    %c0_13 = arith.constant 0 : index
    %c0_14 = arith.constant 0 : index
    %c0_15 = arith.constant 0 : index
    %42 = vector.load %arg3[%c0_13, %c0_14, %c0_15] : memref<1x8x128xf32, #tpu.memory_space<vmem>>, vector<1x8x128xf32>
    tpu.vector_store %arg3[%c0_13, %c0_14, %c0_15], %41 {strides = array<i32>} : memref<1x8x128xf32, #tpu.memory_space<vmem>>, vector<1x8x128xf32>,
    return
  }
  func.func @transform_0(%arg0: i32) -> (i32, i32) {
    %c0_i32 = arith.constant 0 : i32
    %c0_i32_0 = arith.constant 0 : i32
    return %arg0, %c0_i32 : i32, i32
  }
  func.func @transform_1(%arg0: i32) -> (i32, i32) {
    %c0_i32 = arith.constant 0 : i32
    %c0_i32_0 = arith.constant 0 : i32
    %c0_i32_1 = arith.constant 0 : i32
    return %c0_i32, %c0_i32_0 : i32, i32
  }
  func.func @transform_2(%arg0: i32) -> (i32, i32, i32) {
    %c0_i32 = arith.constant 0 : i32
    %c0_i32_0 = arith.constant 0 : i32
    %c0_i32_1 = arith.constant 0 : i32
    return %arg0, %c0_i32, %c0_i32_0 : i32, i32, i32
  }
}

</mosaic_0001>

<llo_original>
// kernel: tpu_custom_call.1
$region0: #{tpu_custom_call.1}
  #allocation0 [shape = 'u32[]', space=smem, size = 0x4, offset = 0x4, fixed_abs, tag = 'smem constant byte address 0x4 - core index']
  #allocation1 [shape = 'u32[144,128]{1,0:T(1,128)}', space=vmem, size = 0x12000, scoped, tag = 'internal scratch']
  %s0 = inlined_call_operand.vmem [shape: f32[96,32], index: 0, kind: input, shape index: {}]
  %s1 = inlined_call_operand.vmem [shape: f32[96,32], index: 1, kind: input, shape index: {}]
  %s2 = inlined_call_operand.hbm [shape: f32[2,8,128], index: 2, kind: output, shape index: {}]
  %s3 = sld [smem:[#allocation0]]
  $region41: #{tpu_custom_call.1} parent=0
    _
  %s5 = ssub.s32 1, %s3
  %s6 = scalar_select 0, %s5, %s3
  $region1: #{tpu_custom_call.1} parent=0
    #allocation2 [shape = 'u8[8192]{0}', space=vmem, size = 0x2000, scoped, tag = 'output window, operand 0']
    #allocation3 [shape = 's32[2]{0}', space=sflag, size = 0x8, scoped, tag = 'scoped memory for tpu_custom_call.1']
    %7 = vsyncpa [#allocation3], 0
    %s8 = scalar_lea.sflag [#allocation3], 1
    %9 = vsyncpa %s8, 0
    loop: start=0, step=1, limit=4
    $region2: #{tpu_custom_call.1} parent=1 // loop_pre_header
      _
    $region3: #{tpu_custom_call.1} parent=1 // loop_header
      %s11 = sphi 0, %s15
      %p12 = scmp.ge.s32.totalorder %s11, 4
      %s21 = sphi 0, %s23
      %s24 = sphi 0, %s21
      %s25 = sphi 0, %s24
      %s41 = sphi 0, %s25
      %s45 = sphi 0, %s45
      %s47 = sphi 0, %s45
      %s48 = sphi 0, %s47
      %s62 = sphi 0, %s48
      %s68 = sphi 0, %s70
      %s71 = sphi 0, %s68
      %s72 = sphi 0, %s71
      %s88 = sphi 0, %s72
    $region4: #{tpu_custom_call.1} parent=1 // loop_header_branch
      %14 = sbr.rel (%p12) target = $region8
    $region5: #{tpu_custom_call.1} parent=1 // loop_body
      %s16 = ssub.s32 %s11, 1
      %s17 = ssub.s32 %s11, 2
      %s18 = sadd.s32 %s11, 1
      %s19 = ssub.s32 %s11, %s18
      %p20 = scmp.eq.s32.totalorder %s19, 0
      %s22 = sadd.s32 %s21, 1
      %s23 = scalar_select %p20, %s21, %s22
      %p26 = pneg %p20
      %p27 = scmp.eq.s32.totalorder %s11, 1
      %p28 = por %p26, %p27
      %p29 = scmp.ne.s32.totalorder %s21, %s24
      %p30 = scmp.eq.s32.totalorder %s11, 0
      %p31 = por %p29, %p30
      %p32 = scmp.ne.s32.totalorder %s21, %s24
      %p33 = scmp.eq.s32.totalorder %s16, 1
      %p34 = por %p32, %p33
      %p35 = scmp.ne.s32.totalorder %s24, %s25
      %p36 = scmp.eq.s32.totalorder %s16, 0
      %p37 = por %p35, %p36
      %p38 = scmp.ne.s32.totalorder %s24, %s25
      %p39 = scmp.eq.s32.totalorder %s17, 1
      %p40 = por %p38, %p39
      %p42 = scmp.ne.s32.totalorder %s25, %s41
      %p43 = scmp.eq.s32.totalorder %s17, 0
      %p44 = por %p42, %p43
      %s46 = sadd.s32 %s45, 1
      %p49 = scmp.eq.s32.totalorder %s11, 1
      %p50 = scmp.ne.s32.totalorder %s45, %s47
      %p51 = scmp.eq.s32.totalorder %s11, 0
      %p52 = por %p50, %p51
      %p53 = scmp.ne.s32.totalorder %s45, %s47
      %p54 = scmp.eq.s32.totalorder %s16, 1
      %p55 = por %p53, %p54
      %p56 = scmp.ne.s32.totalorder %s47, %s48
      %p57 = scmp.eq.s32.totalorder %s16, 0
      %p58 = por %p56, %p57
      %p59 = scmp.ne.s32.totalorder %s47, %s48
      %p60 = scmp.eq.s32.totalorder %s17, 1
      %p61 = por %p59, %p60
      %p63 = scmp.ne.s32.totalorder %s48, %s62
      %p64 = scmp.eq.s32.totalorder %s17, 0
      %p65 = por %p63, %p64
      %s66 = ssub.s32 %s11, %s18
      %p67 = scmp.eq.s32.totalorder %s66, 0
      %s69 = sadd.s32 %s68, 1
      %s70 = scalar_select %p67, %s68, %s69
      %p73 = pneg %p67
      %p74 = scmp.eq.s32.totalorder %s11, 1
      %p75 = por %p73, %p74
      %p76 = scmp.ne.s32.totalorder %s68, %s71
      %p77 = scmp.eq.s32.totalorder %s11, 0
      %p78 = por %p76, %p77
      %p79 = scmp.ne.s32.totalorder %s68, %s71
      %p80 = scmp.eq.s32.totalorder %s16, 1
      %p81 = por %p79, %p80
      %p82 = scmp.ne.s32.totalorder %s71, %s72
      %p83 = scmp.eq.s32.totalorder %s16, 0
      %p84 = por %p82, %p83
      %p85 = scmp.ne.s32.totalorder %s71, %s72
      %p86 = scmp.eq.s32.totalorder %s17, 1
      %p87 = por %p85, %p86
      %p89 = scmp.ne.s32.totalorder %s72, %s88
      %p90 = scmp.eq.s32.totalorder %s17, 0
      %p91 = por %p89, %p90
      %p92 = scmp.le.s32.totalorder 1, %s11
      %p93 = scmp.lt.s32.totalorder %s11, 3
      %p94 = pnand %p92, %p93
      %p95 = pneg %p94
      // Predicated region
      $region9: #{tpu_custom_call.1} parent=5 // pred_check
        _
      $region10: #{tpu_custom_call.1} parent=5 // pred_check_branch
        %97 = sbr.rel (%p94) target = $region12
      $region11: #{tpu_custom_call.1} parent=5 // pred_region
        %s98 = ssub.s32 %s11, 1
        // Predicated region
        $region13: #{tpu_custom_call.1} parent=11 // pred_check
          %p99 = pneg %p58
        $region14: #{tpu_custom_call.1} parent=11 // pred_check_branch
          %101 = sbr.rel (%p99) target = $region16
        $region15: #{tpu_custom_call.1} parent=11 // pred_region
          _
        $region16: #{tpu_custom_call.1} parent=11 // pred_fallthru
          _
      $region12: #{tpu_custom_call.1} parent=5 // pred_fallthru
        _
      %p102 = scmp.lt.s32.totalorder %s11, 2
      // Predicated region
      $region17: #{tpu_custom_call.1} parent=5 // pred_check
        %p103 = pneg %p102
      $region18: #{tpu_custom_call.1} parent=5 // pred_check_branch
        %105 = sbr.rel (%p103) target = $region20
      $region19: #{tpu_custom_call.1} parent=5 // pred_region
        // Predicated region
        $region21: #{tpu_custom_call.1} parent=19 // pred_check
          %p106 = pneg %p31
        $region22: #{tpu_custom_call.1} parent=19 // pred_check_branch
          %108 = sbr.rel (%p106) target = $region24
        $region23: #{tpu_custom_call.1} parent=19 // pred_region
          %s109 = smul.u32 6, %s11
          %p110 = scmp.lt.s32.totalorder %s109, 11
          %s111 = scalar_select %p110, %s109, 11
          %s112 = smul.addr %s111, 8
          %s113 = scalar_lea.vmem %s0, %s112
          %s114 = smul.u32 6, %s11
        $region24: #{tpu_custom_call.1} parent=19 // pred_fallthru
          _
      $region20: #{tpu_custom_call.1} parent=5 // pred_fallthru
        _
      %p115 = scmp.le.s32.totalorder 1, %s11
      %p116 = scmp.lt.s32.totalorder %s11, 3
      %p117 = pnand %p115, %p116
      %p118 = pneg %p117
      // Predicated region
      $region25: #{tpu_custom_call.1} parent=5 // pred_check
        _
      $region26: #{tpu_custom_call.1} parent=5 // pred_check_branch
        %120 = sbr.rel (%p117) target = $region28
      $region27: #{tpu_custom_call.1} parent=5 // pred_region
        %s121 = ssub.s32 %s11, 1
        %s122 = smul.u32 6, %s16
        %p123 = scmp.lt.s32.totalorder %s122, 11
        %s124 = scalar_select %p123, %s122, 11
        %s125 = smul.addr %s124, 8
        %s126 = scalar_lea.vmem %s0, %s125
        %p127 = pneg %p37
        %p128 = pneg %p34
        %p129 = pneg %p58
        %p130 = pneg %p55
        %p131 = pneg %p84
        %p132 = pneg %p81
        %s133 = sand.u32 %s71, 1
        %s134 = scalar_lea.sflag [#allocation3], %s133
        %s135 = sand.u32 %s71, 1
        %s136 = smul.addr %s135, 8
        %s137 = scalar_lea.vmem [#allocation2], %s136
        %s138 = smul.u32 6, %s16
        %p139 = scmp.lt.s32.totalorder %s138, 11
        %s140 = scalar_select %p139, %s138, 11
        %s141 = smul.addr %s140, 8
        %s142 = scalar_lea.vmem %s0, %s141
        %s143 = smul.u32 6, %s16
        %v144 = vld [vmem:[%s142] sm:$0xff]
        %v145 = vld [vmem:[%s142 + $0x8] sm:$0xff]
        %v146 = vld [vmem:[%s142 + $0x10] sm:$0xff]
        %v147 = vld [vmem:[%s142 + $0x18] sm:$0xff]
        %v148 = vld [vmem:[%s142 + $0x20] sm:$0xff]
        %v149 = vld [vmem:[%s142 + $0x28] sm:$0xff]
        %s150 = smul.u32 %s16, 48
        %s151 = scalar_lea.vmem %s1, %s150
        %v152 = vld [vmem:[%s151] sm:$0xff]
        %v153 = vld [vmem:[%s151 + $0x8] sm:$0xff]
        %v154 = vld [vmem:[%s151 + $0x10] sm:$0xff]
        %v155 = vld [vmem:[%s151 + $0x18] sm:$0xff]
        %v156 = vld [vmem:[%s151 + $0x20] sm:$0xff]
        %v157 = vld [vmem:[%s151 + $0x28] sm:$0xff]
        %vm158 = vcmask 261120
        %v160 = vsel %vm158, %v144, 0
        %v163 = vsel %vm158, %v152, 0
        %165 = vmatprep.subr.mxu0 0.0
        %166 = vmatpush1.xpose.msra.mxu0 %v163
        %167 = vmatprep.subr.mxu0 0.0
        %168 = vmatpush1.xpose.msra.mxu0 0.0
        %169 = vmatprep.subr.mxu0 0.0
        %170 = vmatpush1.xpose.msra.mxu0 0.0
        %171 = vmatprep.subr.mxu0 0.0
        %172 = vmatpush1.xpose.msra.mxu0 0.0
        %173 = vmatprep.subr.mxu0 0.0
        %174 = vmatpush1.xpose.msra.mxu0 0.0
        %175 = vmatprep.subr.mxu0 0.0
        %176 = vmatpush1.xpose.msra.mxu0 0.0
        %177 = vmatprep.subr.mxu0 0.0
        %178 = vmatpush1.xpose.msra.mxu0 0.0
        %179 = vmatprep.subr.mxu0 0.0
        %180 = vmatpush1.xpose.msra.mxu0 0.0
        %181 = vmatprep.subr.mxu0 0.0
        %182 = vmatpush1.xpose.msra.mxu0 0.0
        %183 = vmatprep.subr.mxu0 0.0
        %184 = vmatpush1.xpose.msra.mxu0 0.0
        %185 = vmatprep.subr.mxu0 0.0
        %186 = vmatpush1.xpose.msra.mxu0 0.0
        %187 = vmatprep.subr.mxu0 0.0
        %188 = vmatpush1.xpose.msra.mxu0 0.0
        %189 = vmatprep.subr.mxu0 0.0
        %190 = vmatpush1.xpose.msra.mxu0 0.0
        %191 = vmatprep.subr.mxu0 0.0
        %192 = vmatpush1.xpose.msra.mxu0 0.0
        %193 = vmatprep.subr.mxu0 0.0
        %194 = vmatpush1.xpose.msra.mxu0 0.0
        %195 = vmatprep.subr.mxu0 0.0
        %196 = vmatpush1.xpose.msra.mxu0 0.0
        %197 = vmatprep.subr.mxu0 0.0
        %198 = vmatpush1.xpose.msra.mxu0 0.0
        %199 = vmatprep.subr.mxu0 0.0
        %200 = vmatpush1.xpose.msra.mxu0 0.0
        %201 = vmatprep.subr.mxu0 0.0
        %202 = vmatpush1.xpose.msra.mxu0 0.0
        %203 = vmatprep.subr.mxu0 0.0
        %204 = vmatpush1.xpose.msra.mxu0 0.0
        %205 = vmatprep.subr.mxu0 0.0
        %206 = vmatpush1.xpose.msra.mxu0 0.0
        %207 = vmatprep.subr.mxu0 0.0
        %208 = vmatpush1.xpose.msra.mxu0 0.0
        %209 = vmatprep.subr.mxu0 0.0
        %210 = vmatpush1.xpose.msra.mxu0 0.0
        %211 = vmatprep.subr.mxu0 0.0
        %212 = vmatpush1.xpose.msra.mxu0 0.0
        %213 = vmatprep.subr.mxu0 0.0
        %214 = vmatpush1.xpose.msra.mxu0 0.0
        %215 = vmatprep.subr.mxu0 0.0
        %216 = vmatpush1.xpose.msra.mxu0 0.0
        %217 = vmatprep.subr.mxu0 0.0
        %218 = vmatpush1.xpose.msra.mxu0 0.0
        %219 = vmatprep.subr.mxu0 0.0
        %220 = vmatpush1.xpose.msra.mxu0 0.0
        %221 = vmatprep.subr.mxu0 0.0
        %222 = vmatpush1.xpose.msra.mxu0 0.0
        %223 = vmatprep.subr.mxu0 0.0
        %224 = vmatpush1.xpose.msra.mxu0 0.0
        %225 = vmatprep.subr.mxu0 0.0
        %226 = vmatpush1.xpose.msra.mxu0 0.0
        %227 = vmatprep.subr.mxu0 0.0
        %228 = vmatpush1.xpose.msra.mxu0 0.0
        %229 = vmatprep.mubr.f32.mxu0 0.0
        %230 = vmatmul.mubr.f32.gmra.mrb[0].mxu0 %v160
        %v231 = vpop.f32.mrb[0].mxu0
        %v232 = vadd.f32 0.0, %v231
        %v233 = vpop.f32.mrb[0].mxu0
        %234 = vdwg.mxu0
        %v236 = vsel %vm158, %v145, 0
        %v239 = vsel %vm158, %v153, 0
        %241 = vmatprep.subr.mxu0 0.0
        %242 = vmatpush1.xpose.msra.mxu0 %v239
        %243 = vmatprep.subr.mxu0 0.0
        %244 = vmatpush1.xpose.msra.mxu0 0.0
        %245 = vmatprep.subr.mxu0 0.0
        %246 = vmatpush1.xpose.msra.mxu0 0.0
        %247 = vmatprep.subr.mxu0 0.0
        %248 = vmatpush1.xpose.msra.mxu0 0.0
        %249 = vmatprep.subr.mxu0 0.0
        %250 = vmatpush1.xpose.msra.mxu0 0.0
        %251 = vmatprep.subr.mxu0 0.0
        %252 = vmatpush1.xpose.msra.mxu0 0.0
        %253 = vmatprep.subr.mxu0 0.0
        %254 = vmatpush1.xpose.msra.mxu0 0.0
        %255 = vmatprep.subr.mxu0 0.0
        %256 = vmatpush1.xpose.msra.mxu0 0.0
        %257 = vmatprep.subr.mxu0 0.0
        %258 = vmatpush1.xpose.msra.mxu0 0.0
        %259 = vmatprep.subr.mxu0 0.0
        %260 = vmatpush1.xpose.msra.mxu0 0.0
        %261 = vmatprep.subr.mxu0 0.0
        %262 = vmatpush1.xpose.msra.mxu0 0.0
        %263 = vmatprep.subr.mxu0 0.0
        %264 = vmatpush1.xpose.msra.mxu0 0.0
        %265 = vmatprep.subr.mxu0 0.0
        %266 = vmatpush1.xpose.msra.mxu0 0.0
        %267 = vmatprep.subr.mxu0 0.0
        %268 = vmatpush1.xpose.msra.mxu0 0.0
        %269 = vmatprep.subr.mxu0 0.0
        %270 = vmatpush1.xpose.msra.mxu0 0.0
        %271 = vmatprep.subr.mxu0 0.0
        %272 = vmatpush1.xpose.msra.mxu0 0.0
        %273 = vmatprep.subr.mxu0 0.0
        %274 = vmatpush1.xpose.msra.mxu0 0.0
        %275 = vmatprep.subr.mxu0 0.0
        %276 = vmatpush1.xpose.msra.mxu0 0.0
        %277 = vmatprep.subr.mxu0 0.0
        %278 = vmatpush1.xpose.msra.mxu0 0.0
        %279 = vmatprep.subr.mxu0 0.0
        %280 = vmatpush1.xpose.msra.mxu0 0.0
        %281 = vmatprep.subr.mxu0 0.0
        %282 = vmatpush1.xpose.msra.mxu0 0.0
        %283 = vmatprep.subr.mxu0 0.0
        %284 = vmatpush1.xpose.msra.mxu0 0.0
        %285 = vmatprep.subr.mxu0 0.0
        %286 = vmatpush1.xpose.msra.mxu0 0.0
        %287 = vmatprep.subr.mxu0 0.0
        %288 = vmatpush1.xpose.msra.mxu0 0.0
        %289 = vmatprep.subr.mxu0 0.0
        %290 = vmatpush1.xpose.msra.mxu0 0.0
        %291 = vmatprep.subr.mxu0 0.0
        %292 = vmatpush1.xpose.msra.mxu0 0.0
        %293 = vmatprep.subr.mxu0 0.0
        %294 = vmatpush1.xpose.msra.mxu0 0.0
        %295 = vmatprep.subr.mxu0 0.0
        %296 = vmatpush1.xpose.msra.mxu0 0.0
        %297 = vmatprep.subr.mxu0 0.0
        %298 = vmatpush1.xpose.msra.mxu0 0.0
        %299 = vmatprep.subr.mxu0 0.0
        %300 = vmatpush1.xpose.msra.mxu0 0.0
        %301 = vmatprep.subr.mxu0 0.0
        %302 = vmatpush1.xpose.msra.mxu0 0.0
        %303 = vmatprep.subr.mxu0 0.0
        %304 = vmatpush1.xpose.msra.mxu0 0.0
        %305 = vmatprep.mubr.f32.mxu0 0.0
        %306 = vmatmul.mubr.f32.gmra.mrb[0].mxu0 %v236
        %v307 = vpop.f32.mrb[0].mxu0
        %v308 = vadd.f32 0.0, %v307
        %v309 = vpop.f32.mrb[0].mxu0
        %310 = vdwg.mxu0
        %v312 = vsel %vm158, %v146, 0
        %v315 = vsel %vm158, %v154, 0
        %317 = vmatprep.subr.mxu0 0.0
        %318 = vmatpush1.xpose.msra.mxu0 %v315
        %319 = vmatprep.subr.mxu0 0.0
        %320 = vmatpush1.xpose.msra.mxu0 0.0
        %321 = vmatprep.subr.mxu0 0.0
        %322 = vmatpush1.xpose.msra.mxu0 0.0
        %323 = vmatprep.subr.mxu0 0.0
        %324 = vmatpush1.xpose.msra.mxu0 0.0
        %325 = vmatprep.subr.mxu0 0.0
        %326 = vmatpush1.xpose.msra.mxu0 0.0
        %327 = vmatprep.subr.mxu0 0.0
        %328 = vmatpush1.xpose.msra.mxu0 0.0
        %329 = vmatprep.subr.mxu0 0.0
        %330 = vmatpush1.xpose.msra.mxu0 0.0
        %331 = vmatprep.subr.mxu0 0.0
        %332 = vmatpush1.xpose.msra.mxu0 0.0
        %333 = vmatprep.subr.mxu0 0.0
        %334 = vmatpush1.xpose.msra.mxu0 0.0
        %335 = vmatprep.subr.mxu0 0.0
        %336 = vmatpush1.xpose.msra.mxu0 0.0
        %337 = vmatprep.subr.mxu0 0.0
        %338 = vmatpush1.xpose.msra.mxu0 0.0
        %339 = vmatprep.subr.mxu0 0.0
        %340 = vmatpush1.xpose.msra.mxu0 0.0
        %341 = vmatprep.subr.mxu0 0.0
        %342 = vmatpush1.xpose.msra.mxu0 0.0
        %343 = vmatprep.subr.mxu0 0.0
        %344 = vmatpush1.xpose.msra.mxu0 0.0
        %345 = vmatprep.subr.mxu0 0.0
        %346 = vmatpush1.xpose.msra.mxu0 0.0
        %347 = vmatprep.subr.mxu0 0.0
        %348 = vmatpush1.xpose.msra.mxu0 0.0
        %349 = vmatprep.subr.mxu0 0.0
        %350 = vmatpush1.xpose.msra.mxu0 0.0
        %351 = vmatprep.subr.mxu0 0.0
        %352 = vmatpush1.xpose.msra.mxu0 0.0
        %353 = vmatprep.subr.mxu0 0.0
        %354 = vmatpush1.xpose.msra.mxu0 0.0
        %355 = vmatprep.subr.mxu0 0.0
        %356 = vmatpush1.xpose.msra.mxu0 0.0
        %357 = vmatprep.subr.mxu0 0.0
        %358 = vmatpush1.xpose.msra.mxu0 0.0
        %359 = vmatprep.subr.mxu0 0.0
        %360 = vmatpush1.xpose.msra.mxu0 0.0
        %361 = vmatprep.subr.mxu0 0.0
        %362 = vmatpush1.xpose.msra.mxu0 0.0
        %363 = vmatprep.subr.mxu0 0.0
        %364 = vmatpush1.xpose.msra.mxu0 0.0
        %365 = vmatprep.subr.mxu0 0.0
        %366 = vmatpush1.xpose.msra.mxu0 0.0
        %367 = vmatprep.subr.mxu0 0.0
        %368 = vmatpush1.xpose.msra.mxu0 0.0
        %369 = vmatprep.subr.mxu0 0.0
        %370 = vmatpush1.xpose.msra.mxu0 0.0
        %371 = vmatprep.subr.mxu0 0.0
        %372 = vmatpush1.xpose.msra.mxu0 0.0
        %373 = vmatprep.subr.mxu0 0.0
        %374 = vmatpush1.xpose.msra.mxu0 0.0
        %375 = vmatprep.subr.mxu0 0.0
        %376 = vmatpush1.xpose.msra.mxu0 0.0
        %377 = vmatprep.subr.mxu0 0.0
        %378 = vmatpush1.xpose.msra.mxu0 0.0
        %379 = vmatprep.subr.mxu0 0.0
        %380 = vmatpush1.xpose.msra.mxu0 0.0
        %381 = vmatprep.mubr.f32.mxu0 0.0
        %382 = vmatmul.mubr.f32.gmra.mrb[0].mxu0 %v312
        %v383 = vpop.f32.mrb[0].mxu0
        %v384 = vadd.f32 0.0, %v383
        %v385 = vpop.f32.mrb[0].mxu0
        %386 = vdwg.mxu0
        %v388 = vsel %vm158, %v147, 0
        %v391 = vsel %vm158, %v155, 0
        %393 = vmatprep.subr.mxu0 0.0
        %394 = vmatpush1.xpose.msra.mxu0 %v391
        %395 = vmatprep.subr.mxu0 0.0
        %396 = vmatpush1.xpose.msra.mxu0 0.0
        %397 = vmatprep.subr.mxu0 0.0
        %398 = vmatpush1.xpose.msra.mxu0 0.0
        %399 = vmatprep.subr.mxu0 0.0
        %400 = vmatpush1.xpose.msra.mxu0 0.0
        %401 = vmatprep.subr.mxu0 0.0
        %402 = vmatpush1.xpose.msra.mxu0 0.0
        %403 = vmatprep.subr.mxu0 0.0
        %404 = vmatpush1.xpose.msra.mxu0 0.0
        %405 = vmatprep.subr.mxu0 0.0
        %406 = vmatpush1.xpose.msra.mxu0 0.0
        %407 = vmatprep.subr.mxu0 0.0
        %408 = vmatpush1.xpose.msra.mxu0 0.0
        %409 = vmatprep.subr.mxu0 0.0
        %410 = vmatpush1.xpose.msra.mxu0 0.0
        %411 = vmatprep.subr.mxu0 0.0
        %412 = vmatpush1.xpose.msra.mxu0 0.0
        %413 = vmatprep.subr.mxu0 0.0
        %414 = vmatpush1.xpose.msra.mxu0 0.0
        %415 = vmatprep.subr.mxu0 0.0
        %416 = vmatpush1.xpose.msra.mxu0 0.0
        %417 = vmatprep.subr.mxu0 0.0
        %418 = vmatpush1.xpose.msra.mxu0 0.0
        %419 = vmatprep.subr.mxu0 0.0
        %420 = vmatpush1.xpose.msra.mxu0 0.0
        %421 = vmatprep.subr.mxu0 0.0
        %422 = vmatpush1.xpose.msra.mxu0 0.0
        %423 = vmatprep.subr.mxu0 0.0
        %424 = vmatpush1.xpose.msra.mxu0 0.0
        %425 = vmatprep.subr.mxu0 0.0
        %426 = vmatpush1.xpose.msra.mxu0 0.0
        %427 = vmatprep.subr.mxu0 0.0
        %428 = vmatpush1.xpose.msra.mxu0 0.0
        %429 = vmatprep.subr.mxu0 0.0
        %430 = vmatpush1.xpose.msra.mxu0 0.0
        %431 = vmatprep.subr.mxu0 0.0
        %432 = vmatpush1.xpose.msra.mxu0 0.0
        %433 = vmatprep.subr.mxu0 0.0
        %434 = vmatpush1.xpose.msra.mxu0 0.0
        %435 = vmatprep.subr.mxu0 0.0
        %436 = vmatpush1.xpose.msra.mxu0 0.0
        %437 = vmatprep.subr.mxu0 0.0
        %438 = vmatpush1.xpose.msra.mxu0 0.0
        %439 = vmatprep.subr.mxu0 0.0
        %440 = vmatpush1.xpose.msra.mxu0 0.0
        %441 = vmatprep.subr.mxu0 0.0
        %442 = vmatpush1.xpose.msra.mxu0 0.0
        %443 = vmatprep.subr.mxu0 0.0
        %444 = vmatpush1.xpose.msra.mxu0 0.0
        %445 = vmatprep.subr.mxu0 0.0
        %446 = vmatpush1.xpose.msra.mxu0 0.0
        %447 = vmatprep.subr.mxu0 0.0
        %448 = vmatpush1.xpose.msra.mxu0 0.0
        %449 = vmatprep.subr.mxu0 0.0
        %450 = vmatpush1.xpose.msra.mxu0 0.0
        %451 = vmatprep.subr.mxu0 0.0
        %452 = vmatpush1.xpose.msra.mxu0 0.0
        %453 = vmatprep.subr.mxu0 0.0
        %454 = vmatpush1.xpose.msra.mxu0 0.0
        %455 = vmatprep.subr.mxu0 0.0
        %456 = vmatpush1.xpose.msra.mxu0 0.0
        %457 = vmatprep.mubr.f32.mxu0 0.0
        %458 = vmatmul.mubr.f32.gmra.mrb[0].mxu0 %v388
        %v459 = vpop.f32.mrb[0].mxu0
        %v460 = vadd.f32 0.0, %v459
        %v461 = vpop.f32.mrb[0].mxu0
        %462 = vdwg.mxu0
        %v464 = vsel %vm158, %v148, 0
        %v467 = vsel %vm158, %v156, 0
        %469 = vmatprep.subr.mxu0 0.0
        %470 = vmatpush1.xpose.msra.mxu0 %v467
        %471 = vmatprep.subr.mxu0 0.0
        %472 = vmatpush1.xpose.msra.mxu0 0.0
        %473 = vmatprep.subr.mxu0 0.0
        %474 = vmatpush1.xpose.msra.mxu0 0.0
        %475 = vmatprep.subr.mxu0 0.0
        %476 = vmatpush1.xpose.msra.mxu0 0.0
        %477 = vmatprep.subr.mxu0 0.0
        %478 = vmatpush1.xpose.msra.mxu0 0.0
        %479 = vmatprep.subr.mxu0 0.0
        %480 = vmatpush1.xpose.msra.mxu0 0.0
        %481 = vmatprep.subr.mxu0 0.0
        %482 = vmatpush1.xpose.msra.mxu0 0.0
        %483 = vmatprep.subr.mxu0 0.0
        %484 = vmatpush1.xpose.msra.mxu0 0.0
        %485 = vmatprep.subr.mxu0 0.0
        %486 = vmatpush1.xpose.msra.mxu0 0.0
        %487 = vmatprep.subr.mxu0 0.0
        %488 = vmatpush1.xpose.msra.mxu0 0.0
        %489 = vmatprep.subr.mxu0 0.0
        %490 = vmatpush1.xpose.msra.mxu0 0.0
        %491 = vmatprep.subr.mxu0 0.0
        %492 = vmatpush1.xpose.msra.mxu0 0.0
        %493 = vmatprep.subr.mxu0 0.0
        %494 = vmatpush1.xpose.msra.mxu0 0.0
        %495 = vmatprep.subr.mxu0 0.0
        %496 = vmatpush1.xpose.msra.mxu0 0.0
        %497 = vmatprep.subr.mxu0 0.0
        %498 = vmatpush1.xpose.msra.mxu0 0.0
        %499 = vmatprep.subr.mxu0 0.0
        %500 = vmatpush1.xpose.msra.mxu0 0.0
        %501 = vmatprep.subr.mxu0 0.0
        %502 = vmatpush1.xpose.msra.mxu0 0.0
        %503 = vmatprep.subr.mxu0 0.0
        %504 = vmatpush1.xpose.msra.mxu0 0.0
        %505 = vmatprep.subr.mxu0 0.0
        %506 = vmatpush1.xpose.msra.mxu0 0.0
        %507 = vmatprep.subr.mxu0 0.0
        %508 = vmatpush1.xpose.msra.mxu0 0.0
        %509 = vmatprep.subr.mxu0 0.0
        %510 = vmatpush1.xpose.msra.mxu0 0.0
        %511 = vmatprep.subr.mxu0 0.0
        %512 = vmatpush1.xpose.msra.mxu0 0.0
        %513 = vmatprep.subr.mxu0 0.0
        %514 = vmatpush1.xpose.msra.mxu0 0.0
        %515 = vmatprep.subr.mxu0 0.0
        %516 = vmatpush1.xpose.msra.mxu0 0.0
        %517 = vmatprep.subr.mxu0 0.0
        %518 = vmatpush1.xpose.msra.mxu0 0.0
        %519 = vmatprep.subr.mxu0 0.0
        %520 = vmatpush1.xpose.msra.mxu0 0.0
        %521 = vmatprep.subr.mxu0 0.0
        %522 = vmatpush1.xpose.msra.mxu0 0.0
        %523 = vmatprep.subr.mxu0 0.0
        %524 = vmatpush1.xpose.msra.mxu0 0.0
        %525 = vmatprep.subr.mxu0 0.0
        %526 = vmatpush1.xpose.msra.mxu0 0.0
        %527 = vmatprep.subr.mxu0 0.0
        %528 = vmatpush1.xpose.msra.mxu0 0.0
        %529 = vmatprep.subr.mxu0 0.0
        %530 = vmatpush1.xpose.msra.mxu0 0.0
        %531 = vmatprep.subr.mxu0 0.0
        %532 = vmatpush1.xpose.msra.mxu0 0.0
        %533 = vmatprep.mubr.f32.mxu0 0.0
        %534 = vmatmul.mubr.f32.gmra.mrb[0].mxu0 %v464
        %v535 = vpop.f32.mrb[0].mxu0
        %v536 = vadd.f32 0.0, %v535
        %v537 = vpop.f32.mrb[0].mxu0
        %538 = vdwg.mxu0
        %v540 = vsel %vm158, %v149, 0
        %v543 = vsel %vm158, %v157, 0
        %545 = vmatprep.subr.mxu0 0.0
        %546 = vmatpush1.xpose.msra.mxu0 %v543
        %547 = vmatprep.subr.mxu0 0.0
        %548 = vmatpush1.xpose.msra.mxu0 0.0
        %549 = vmatprep.subr.mxu0 0.0
        %550 = vmatpush1.xpose.msra.mxu0 0.0
        %551 = vmatprep.subr.mxu0 0.0
        %552 = vmatpush1.xpose.msra.mxu0 0.0
        %553 = vmatprep.subr.mxu0 0.0
        %554 = vmatpush1.xpose.msra.mxu0 0.0
        %555 = vmatprep.subr.mxu0 0.0
        %556 = vmatpush1.xpose.msra.mxu0 0.0
        %557 = vmatprep.subr.mxu0 0.0
        %558 = vmatpush1.xpose.msra.mxu0 0.0
        %559 = vmatprep.subr.mxu0 0.0
        %560 = vmatpush1.xpose.msra.mxu0 0.0
        %561 = vmatprep.subr.mxu0 0.0
        %562 = vmatpush1.xpose.msra.mxu0 0.0
        %563 = vmatprep.subr.mxu0 0.0
        %564 = vmatpush1.xpose.msra.mxu0 0.0
        %565 = vmatprep.subr.mxu0 0.0
        %566 = vmatpush1.xpose.msra.mxu0 0.0
        %567 = vmatprep.subr.mxu0 0.0
        %568 = vmatpush1.xpose.msra.mxu0 0.0
        %569 = vmatprep.subr.mxu0 0.0
        %570 = vmatpush1.xpose.msra.mxu0 0.0
        %571 = vmatprep.subr.mxu0 0.0
        %572 = vmatpush1.xpose.msra.mxu0 0.0
        %573 = vmatprep.subr.mxu0 0.0
        %574 = vmatpush1.xpose.msra.mxu0 0.0
        %575 = vmatprep.subr.mxu0 0.0
        %576 = vmatpush1.xpose.msra.mxu0 0.0
        %577 = vmatprep.subr.mxu0 0.0
        %578 = vmatpush1.xpose.msra.mxu0 0.0
        %579 = vmatprep.subr.mxu0 0.0
        %580 = vmatpush1.xpose.msra.mxu0 0.0
        %581 = vmatprep.subr.mxu0 0.0
        %582 = vmatpush1.xpose.msra.mxu0 0.0
        %583 = vmatprep.subr.mxu0 0.0
        %584 = vmatpush1.xpose.msra.mxu0 0.0
        %585 = vmatprep.subr.mxu0 0.0
        %586 = vmatpush1.xpose.msra.mxu0 0.0
        %587 = vmatprep.subr.mxu0 0.0
        %588 = vmatpush1.xpose.msra.mxu0 0.0
        %589 = vmatprep.subr.mxu0 0.0
        %590 = vmatpush1.xpose.msra.mxu0 0.0
        %591 = vmatprep.subr.mxu0 0.0
        %592 = vmatpush1.xpose.msra.mxu0 0.0
        %593 = vmatprep.subr.mxu0 0.0
        %594 = vmatpush1.xpose.msra.mxu0 0.0
        %595 = vmatprep.subr.mxu0 0.0
        %596 = vmatpush1.xpose.msra.mxu0 0.0
        %597 = vmatprep.subr.mxu0 0.0
        %598 = vmatpush1.xpose.msra.mxu0 0.0
        %599 = vmatprep.subr.mxu0 0.0
        %600 = vmatpush1.xpose.msra.mxu0 0.0
        %601 = vmatprep.subr.mxu0 0.0
        %602 = vmatpush1.xpose.msra.mxu0 0.0
        %603 = vmatprep.subr.mxu0 0.0
        %604 = vmatpush1.xpose.msra.mxu0 0.0
        %605 = vmatprep.subr.mxu0 0.0
        %606 = vmatpush1.xpose.msra.mxu0 0.0
        %607 = vmatprep.subr.mxu0 0.0
        %608 = vmatpush1.xpose.msra.mxu0 0.0
        %609 = vmatprep.mubr.f32.mxu0 0.0
        %610 = vmatmul.mubr.f32.gmra.mrb[0].mxu0 %v540
        %v611 = vpop.f32.mrb[0].mxu0
        %v612 = vadd.f32 0.0, %v611
        %v613 = vpop.f32.mrb[0].mxu0
        %614 = vdwg.mxu0
        %v621 = vcombine.high %v232, %v232
        %v623 = vunpack.c.l.s4 1966171168
        %v624 = vunpack.c.0.s8 %v623
        %v625 = vlaneseq
        %v626 = vshrl.u32 %v625, 7
        %v627 = vsub.s32 %v624, %v626
        %v628 = vrot.slane %v232, %v627
        %v630 = vunpack.c.l.s4 1966171168
        %v631 = vunpack.c.0.s8 %v630
        %v632 = vlaneseq
        %v633 = vshrl.u32 %v632, 7
        %v634 = vsub.s32 %v631, %v633
        %v635 = vrot.slane %v621, %v634
        %v636 = vcombine.high %v628, %v628
        %v637 = vcombine.high %v635, %v635
        %v639 = vunpack.c.l.s4 1966171168
        %v640 = vunpack.c.0.s8 %v639
        %v641 = vlaneseq
        %v642 = vshrl.u32 %v641, 7
        %v643 = vsub.s32 %v640, %v642
        %v644 = vrot.slane %v628, %v643
        %v646 = vunpack.c.l.s4 1966171168
        %v647 = vunpack.c.0.s8 %v646
        %v648 = vlaneseq
        %v649 = vshrl.u32 %v648, 7
        %v650 = vsub.s32 %v647, %v649
        %v651 = vrot.slane %v635, %v650
        %v653 = vunpack.c.l.s4 1966171168
        %v654 = vunpack.c.0.s8 %v653
        %v655 = vlaneseq
        %v656 = vshrl.u32 %v655, 7
        %v657 = vsub.s32 %v654, %v656
        %v658 = vrot.slane %v636, %v657
        %v660 = vunpack.c.l.s4 1966171168
        %v661 = vunpack.c.0.s8 %v660
        %v662 = vlaneseq
        %v663 = vshrl.u32 %v662, 7
        %v664 = vsub.s32 %v661, %v663
        %v665 = vrot.slane %v637, %v664
        %v666 = vcombine.high %v644, %v644
        %v667 = vcombine.high %v651, %v651
        %v668 = vcombine.high %v658, %v658
        %v669 = vcombine.high %v665, %v665
        %v670 = vcombine.high %v308, %v308
        %v672 = vunpack.c.l.s4 1966171168
        %v673 = vunpack.c.0.s8 %v672
        %v674 = vlaneseq
        %v675 = vshrl.u32 %v674, 7
        %v676 = vsub.s32 %v673, %v675
        %v677 = vrot.slane %v308, %v676
        %v679 = vunpack.c.l.s4 1966171168
        %v680 = vunpack.c.0.s8 %v679
        %v681 = vlaneseq
        %v682 = vshrl.u32 %v681, 7
        %v683 = vsub.s32 %v680, %v682
        %v684 = vrot.slane %v670, %v683
        %v685 = vcombine.high %v677, %v677
        %v686 = vcombine.high %v684, %v684
        %v688 = vunpack.c.l.s4 1966171168
        %v689 = vunpack.c.0.s8 %v688
        %v690 = vlaneseq
        %v691 = vshrl.u32 %v690, 7
        %v692 = vsub.s32 %v689, %v691
        %v693 = vrot.slane %v677, %v692
        %v695 = vunpack.c.l.s4 1966171168
        %v696 = vunpack.c.0.s8 %v695
        %v697 = vlaneseq
        %v698 = vshrl.u32 %v697, 7
        %v699 = vsub.s32 %v696, %v698
        %v700 = vrot.slane %v684, %v699
        %v702 = vunpack.c.l.s4 1966171168
        %v703 = vunpack.c.0.s8 %v702
        %v704 = vlaneseq
        %v705 = vshrl.u32 %v704, 7
        %v706 = vsub.s32 %v703, %v705
        %v707 = vrot.slane %v685, %v706
        %v709 = vunpack.c.l.s4 1966171168
        %v710 = vunpack.c.0.s8 %v709
        %v711 = vlaneseq
        %v712 = vshrl.u32 %v711, 7
        %v713 = vsub.s32 %v710, %v712
        %v714 = vrot.slane %v686, %v713
        %v715 = vcombine.high %v693, %v693
        %v716 = vcombine.high %v700, %v700
        %v717 = vcombine.high %v707, %v707
        %v718 = vcombine.high %v714, %v714
        %v719 = vcombine.high %v384, %v384
        %v721 = vunpack.c.l.s4 1966171168
        %v722 = vunpack.c.0.s8 %v721
        %v723 = vlaneseq
        %v724 = vshrl.u32 %v723, 7
        %v725 = vsub.s32 %v722, %v724
        %v726 = vrot.slane %v384, %v725
        %v728 = vunpack.c.l.s4 1966171168
        %v729 = vunpack.c.0.s8 %v728
        %v730 = vlaneseq
        %v731 = vshrl.u32 %v730, 7
        %v732 = vsub.s32 %v729, %v731
        %v733 = vrot.slane %v719, %v732
        %v734 = vcombine.high %v726, %v726
        %v735 = vcombine.high %v733, %v733
        %v737 = vunpack.c.l.s4 1966171168
        %v738 = vunpack.c.0.s8 %v737
        %v739 = vlaneseq
        %v740 = vshrl.u32 %v739, 7
        %v741 = vsub.s32 %v738, %v740
        %v742 = vrot.slane %v726, %v741
        %v744 = vunpack.c.l.s4 1966171168
        %v745 = vunpack.c.0.s8 %v744
        %v746 = vlaneseq
        %v747 = vshrl.u32 %v746, 7
        %v748 = vsub.s32 %v745, %v747
        %v749 = vrot.slane %v733, %v748
        %v751 = vunpack.c.l.s4 1966171168
        %v752 = vunpack.c.0.s8 %v751
        %v753 = vlaneseq
        %v754 = vshrl.u32 %v753, 7
        %v755 = vsub.s32 %v752, %v754
        %v756 = vrot.slane %v734, %v755
        %v758 = vunpack.c.l.s4 1966171168
        %v759 = vunpack.c.0.s8 %v758
        %v760 = vlaneseq
        %v761 = vshrl.u32 %v760, 7
        %v762 = vsub.s32 %v759, %v761
        %v763 = vrot.slane %v735, %v762
        %v764 = vcombine.high %v742, %v742
        %v765 = vcombine.high %v749, %v749
        %v766 = vcombine.high %v756, %v756
        %v767 = vcombine.high %v763, %v763
        %v768 = vcombine.high %v460, %v460
        %v770 = vunpack.c.l.s4 1966171168
        %v771 = vunpack.c.0.s8 %v770
        %v772 = vlaneseq
        %v773 = vshrl.u32 %v772, 7
        %v774 = vsub.s32 %v771, %v773
        %v775 = vrot.slane %v460, %v774
        %v777 = vunpack.c.l.s4 1966171168
        %v778 = vunpack.c.0.s8 %v777
        %v779 = vlaneseq
        %v780 = vshrl.u32 %v779, 7
        %v781 = vsub.s32 %v778, %v780
        %v782 = vrot.slane %v768, %v781
        %v783 = vcombine.high %v775, %v775
        %v784 = vcombine.high %v782, %v782
        %v786 = vunpack.c.l.s4 1966171168
        %v787 = vunpack.c.0.s8 %v786
        %v788 = vlaneseq
        %v789 = vshrl.u32 %v788, 7
        %v790 = vsub.s32 %v787, %v789
        %v791 = vrot.slane %v775, %v790
        %v793 = vunpack.c.l.s4 1966171168
        %v794 = vunpack.c.0.s8 %v793
        %v795 = vlaneseq
        %v796 = vshrl.u32 %v795, 7
        %v797 = vsub.s32 %v794, %v796
        %v798 = vrot.slane %v782, %v797
        %v800 = vunpack.c.l.s4 1966171168
        %v801 = vunpack.c.0.s8 %v800
        %v802 = vlaneseq
        %v803 = vshrl.u32 %v802, 7
        %v804 = vsub.s32 %v801, %v803
        %v805 = vrot.slane %v783, %v804
        %v807 = vunpack.c.l.s4 1966171168
        %v808 = vunpack.c.0.s8 %v807
        %v809 = vlaneseq
        %v810 = vshrl.u32 %v809, 7
        %v811 = vsub.s32 %v808, %v810
        %v812 = vrot.slane %v784, %v811
        %v813 = vcombine.high %v791, %v791
        %v814 = vcombine.high %v798, %v798
        %v815 = vcombine.high %v805, %v805
        %v816 = vcombine.high %v812, %v812
        %v817 = vcombine.high %v536, %v536
        %v819 = vunpack.c.l.s4 1966171168
        %v820 = vunpack.c.0.s8 %v819
        %v821 = vlaneseq
        %v822 = vshrl.u32 %v821, 7
        %v823 = vsub.s32 %v820, %v822
        %v824 = vrot.slane %v536, %v823
        %v826 = vunpack.c.l.s4 1966171168
        %v827 = vunpack.c.0.s8 %v826
        %v828 = vlaneseq
        %v829 = vshrl.u32 %v828, 7
        %v830 = vsub.s32 %v827, %v829
        %v831 = vrot.slane %v817, %v830
        %v832 = vcombine.high %v824, %v824
        %v833 = vcombine.high %v831, %v831
        %v835 = vunpack.c.l.s4 1966171168
        %v836 = vunpack.c.0.s8 %v835
        %v837 = vlaneseq
        %v838 = vshrl.u32 %v837, 7
        %v839 = vsub.s32 %v836, %v838
        %v840 = vrot.slane %v824, %v839
        %v842 = vunpack.c.l.s4 1966171168
        %v843 = vunpack.c.0.s8 %v842
        %v844 = vlaneseq
        %v845 = vshrl.u32 %v844, 7
        %v846 = vsub.s32 %v843, %v845
        %v847 = vrot.slane %v831, %v846
        %v849 = vunpack.c.l.s4 1966171168
        %v850 = vunpack.c.0.s8 %v849
        %v851 = vlaneseq
        %v852 = vshrl.u32 %v851, 7
        %v853 = vsub.s32 %v850, %v852
        %v854 = vrot.slane %v832, %v853
        %v856 = vunpack.c.l.s4 1966171168
        %v857 = vunpack.c.0.s8 %v856
        %v858 = vlaneseq
        %v859 = vshrl.u32 %v858, 7
        %v860 = vsub.s32 %v857, %v859
        %v861 = vrot.slane %v833, %v860
        %v862 = vcombine.high %v840, %v840
        %v863 = vcombine.high %v847, %v847
        %v864 = vcombine.high %v854, %v854
        %v865 = vcombine.high %v861, %v861
        %v866 = vcombine.high %v612, %v612
        %v868 = vunpack.c.l.s4 1966171168
        %v869 = vunpack.c.0.s8 %v868
        %v870 = vlaneseq
        %v871 = vshrl.u32 %v870, 7
        %v872 = vsub.s32 %v869, %v871
        %v873 = vrot.slane %v612, %v872
        %v875 = vunpack.c.l.s4 1966171168
        %v876 = vunpack.c.0.s8 %v875
        %v877 = vlaneseq
        %v878 = vshrl.u32 %v877, 7
        %v879 = vsub.s32 %v876, %v878
        %v880 = vrot.slane %v866, %v879
        %v881 = vcombine.high %v873, %v873
        %v882 = vcombine.high %v880, %v880
        %v884 = vunpack.c.l.s4 1966171168
        %v885 = vunpack.c.0.s8 %v884
        %v886 = vlaneseq
        %v887 = vshrl.u32 %v886, 7
        %v888 = vsub.s32 %v885, %v887
        %v889 = vrot.slane %v873, %v888
        %v891 = vunpack.c.l.s4 1966171168
        %v892 = vunpack.c.0.s8 %v891
        %v893 = vlaneseq
        %v894 = vshrl.u32 %v893, 7
        %v895 = vsub.s32 %v892, %v894
        %v896 = vrot.slane %v880, %v895
        %v898 = vunpack.c.l.s4 1966171168
        %v899 = vunpack.c.0.s8 %v898
        %v900 = vlaneseq
        %v901 = vshrl.u32 %v900, 7
        %v902 = vsub.s32 %v899, %v901
        %v903 = vrot.slane %v881, %v902
        %v905 = vunpack.c.l.s4 1966171168
        %v906 = vunpack.c.0.s8 %v905
        %v907 = vlaneseq
        %v908 = vshrl.u32 %v907, 7
        %v909 = vsub.s32 %v906, %v908
        %v910 = vrot.slane %v882, %v909
        %v911 = vcombine.high %v889, %v889
        %v912 = vcombine.high %v896, %v896
        %v913 = vcombine.high %v903, %v903
        %v914 = vcombine.high %v910, %v910
        %v915 = vlaneseq
        %v916 = vshrl.u32 %v915, 7
        %v917 = vsub.s32 0, %v916
        %v918 = vrot.slane %v232, %v917
        %920 = vbcast.lane.b32.xlu0 %v918, 256
        %v921 = vpop.permute.xlu0 %920
        %v922 = vlaneseq
        %v923 = vshrl.u32 %v922, 7
        %v924 = vsub.s32 1, %v923
        %v925 = vrot.slane %v232, %v924
        %927 = vbcast.lane.b32.xlu0 %v925, 256
        %v928 = vpop.permute.xlu0 %927
        %v929 = vlaneseq
        %v930 = vshrl.u32 %v929, 7
        %v931 = vsub.s32 2, %v930
        %v932 = vrot.slane %v232, %v931
        %934 = vbcast.lane.b32.xlu0 %v932, 256
        %v935 = vpop.permute.xlu0 %934
        %v936 = vlaneseq
        %v937 = vshrl.u32 %v936, 7
        %v938 = vsub.s32 3, %v937
        %v939 = vrot.slane %v232, %v938
        %941 = vbcast.lane.b32.xlu0 %v939, 256
        %v942 = vpop.permute.xlu0 %941
        %v943 = vlaneseq
        %v944 = vshrl.u32 %v943, 7
        %v945 = vsub.s32 4, %v944
        %v946 = vrot.slane %v232, %v945
        %948 = vbcast.lane.b32.xlu0 %v946, 256
        %v949 = vpop.permute.xlu0 %948
        %v950 = vlaneseq
        %v951 = vshrl.u32 %v950, 7
        %v952 = vsub.s32 5, %v951
        %v953 = vrot.slane %v232, %v952
        %955 = vbcast.lane.b32.xlu0 %v953, 256
        %v956 = vpop.permute.xlu0 %955
        %v957 = vlaneseq
        %v958 = vshrl.u32 %v957, 7
        %v959 = vsub.s32 6, %v958
        %v960 = vrot.slane %v232, %v959
        %962 = vbcast.lane.b32.xlu0 %v960, 256
        %v963 = vpop.permute.xlu0 %962
        %v964 = vlaneseq
        %v965 = vshrl.u32 %v964, 7
        %v966 = vsub.s32 7, %v965
        %v967 = vrot.slane %v232, %v966
        %969 = vbcast.lane.b32.xlu0 %v967, 256
        %v970 = vpop.permute.xlu0 %969
        %v971 = vlaneseq
        %v972 = vshrl.u32 %v971, 7
        %v973 = vsub.s32 0, %v972
        %v974 = vrot.slane %v308, %v973
        %976 = vbcast.lane.b32.xlu0 %v974, 256
        %v977 = vpop.permute.xlu0 %976
        %v978 = vlaneseq
        %v979 = vshrl.u32 %v978, 7
        %v980 = vsub.s32 1, %v979
        %v981 = vrot.slane %v308, %v980
        %983 = vbcast.lane.b32.xlu0 %v981, 256
        %v984 = vpop.permute.xlu0 %983
        %v985 = vlaneseq
        %v986 = vshrl.u32 %v985, 7
        %v987 = vsub.s32 2, %v986
        %v988 = vrot.slane %v308, %v987
        %990 = vbcast.lane.b32.xlu0 %v988, 256
        %v991 = vpop.permute.xlu0 %990
        %v992 = vlaneseq
        %v993 = vshrl.u32 %v992, 7
        %v994 = vsub.s32 3, %v993
        %v995 = vrot.slane %v308, %v994
        %997 = vbcast.lane.b32.xlu0 %v995, 256
        %v998 = vpop.permute.xlu0 %997
        %v999 = vlaneseq
        %v1000 = vshrl.u32 %v999, 7
        %v1001 = vsub.s32 4, %v1000
        %v1002 = vrot.slane %v308, %v1001
        %1004 = vbcast.lane.b32.xlu0 %v1002, 256
        %v1005 = vpop.permute.xlu0 %1004
        %v1006 = vlaneseq
        %v1007 = vshrl.u32 %v1006, 7
        %v1008 = vsub.s32 5, %v1007
        %v1009 = vrot.slane %v308, %v1008
        %1011 = vbcast.lane.b32.xlu0 %v1009, 256
        %v1012 = vpop.permute.xlu0 %1011
        %v1013 = vlaneseq
        %v1014 = vshrl.u32 %v1013, 7
        %v1015 = vsub.s32 6, %v1014
        %v1016 = vrot.slane %v308, %v1015
        %1018 = vbcast.lane.b32.xlu0 %v1016, 256
        %v1019 = vpop.permute.xlu0 %1018
        %v1020 = vlaneseq
        %v1021 = vshrl.u32 %v1020, 7
        %v1022 = vsub.s32 7, %v1021
        %v1023 = vrot.slane %v308, %v1022
        %1025 = vbcast.lane.b32.xlu0 %v1023, 256
        %v1026 = vpop.permute.xlu0 %1025
        %v1027 = vlaneseq
        %v1028 = vshrl.u32 %v1027, 7
        %v1029 = vsub.s32 0, %v1028
        %v1030 = vrot.slane %v384, %v1029
        %1032 = vbcast.lane.b32.xlu0 %v1030, 256
        %v1033 = vpop.permute.xlu0 %1032
        %v1034 = vlaneseq
        %v1035 = vshrl.u32 %v1034, 7
        %v1036 = vsub.s32 1, %v1035
        %v1037 = vrot.slane %v384, %v1036
        %1039 = vbcast.lane.b32.xlu0 %v1037, 256
        %v1040 = vpop.permute.xlu0 %1039
        %v1041 = vlaneseq
        %v1042 = vshrl.u32 %v1041, 7
        %v1043 = vsub.s32 2, %v1042
        %v1044 = vrot.slane %v384, %v1043
        %1046 = vbcast.lane.b32.xlu0 %v1044, 256
        %v1047 = vpop.permute.xlu0 %1046
        %v1048 = vlaneseq
        %v1049 = vshrl.u32 %v1048, 7
        %v1050 = vsub.s32 3, %v1049
        %v1051 = vrot.slane %v384, %v1050
        %1053 = vbcast.lane.b32.xlu0 %v1051, 256
        %v1054 = vpop.permute.xlu0 %1053
        %v1055 = vlaneseq
        %v1056 = vshrl.u32 %v1055, 7
        %v1057 = vsub.s32 4, %v1056
        %v1058 = vrot.slane %v384, %v1057
        %1060 = vbcast.lane.b32.xlu0 %v1058, 256
        %v1061 = vpop.permute.xlu0 %1060
        %v1062 = vlaneseq
        %v1063 = vshrl.u32 %v1062, 7
        %v1064 = vsub.s32 5, %v1063
        %v1065 = vrot.slane %v384, %v1064
        %1067 = vbcast.lane.b32.xlu0 %v1065, 256
        %v1068 = vpop.permute.xlu0 %1067
        %v1069 = vlaneseq
        %v1070 = vshrl.u32 %v1069, 7
        %v1071 = vsub.s32 6, %v1070
        %v1072 = vrot.slane %v384, %v1071
        %1074 = vbcast.lane.b32.xlu0 %v1072, 256
        %v1075 = vpop.permute.xlu0 %1074
        %v1076 = vlaneseq
        %v1077 = vshrl.u32 %v1076, 7
        %v1078 = vsub.s32 7, %v1077
        %v1079 = vrot.slane %v384, %v1078
        %1081 = vbcast.lane.b32.xlu0 %v1079, 256
        %v1082 = vpop.permute.xlu0 %1081
        %v1083 = vlaneseq
        %v1084 = vshrl.u32 %v1083, 7
        %v1085 = vsub.s32 0, %v1084
        %v1086 = vrot.slane %v460, %v1085
        %1088 = vbcast.lane.b32.xlu0 %v1086, 256
        %v1089 = vpop.permute.xlu0 %1088
        %v1090 = vlaneseq
        %v1091 = vshrl.u32 %v1090, 7
        %v1092 = vsub.s32 1, %v1091
        %v1093 = vrot.slane %v460, %v1092
        %1095 = vbcast.lane.b32.xlu0 %v1093, 256
        %v1096 = vpop.permute.xlu0 %1095
        %v1097 = vlaneseq
        %v1098 = vshrl.u32 %v1097, 7
        %v1099 = vsub.s32 2, %v1098
        %v1100 = vrot.slane %v460, %v1099
        %1102 = vbcast.lane.b32.xlu0 %v1100, 256
        %v1103 = vpop.permute.xlu0 %1102
        %v1104 = vlaneseq
        %v1105 = vshrl.u32 %v1104, 7
        %v1106 = vsub.s32 3, %v1105
        %v1107 = vrot.slane %v460, %v1106
        %1109 = vbcast.lane.b32.xlu0 %v1107, 256
        %v1110 = vpop.permute.xlu0 %1109
        %v1111 = vlaneseq
        %v1112 = vshrl.u32 %v1111, 7
        %v1113 = vsub.s32 4, %v1112
        %v1114 = vrot.slane %v460, %v1113
        %1116 = vbcast.lane.b32.xlu0 %v1114, 256
        %v1117 = vpop.permute.xlu0 %1116
        %v1118 = vlaneseq
        %v1119 = vshrl.u32 %v1118, 7
        %v1120 = vsub.s32 5, %v1119
        %v1121 = vrot.slane %v460, %v1120
        %1123 = vbcast.lane.b32.xlu0 %v1121, 256
        %v1124 = vpop.permute.xlu0 %1123
        %v1125 = vlaneseq
        %v1126 = vshrl.u32 %v1125, 7
        %v1127 = vsub.s32 6, %v1126
        %v1128 = vrot.slane %v460, %v1127
        %1130 = vbcast.lane.b32.xlu0 %v1128, 256
        %v1131 = vpop.permute.xlu0 %1130
        %v1132 = vlaneseq
        %v1133 = vshrl.u32 %v1132, 7
        %v1134 = vsub.s32 7, %v1133
        %v1135 = vrot.slane %v460, %v1134
        %1137 = vbcast.lane.b32.xlu0 %v1135, 256
        %v1138 = vpop.permute.xlu0 %1137
        %v1139 = vlaneseq
        %v1140 = vshrl.u32 %v1139, 7
        %v1141 = vsub.s32 0, %v1140
        %v1142 = vrot.slane %v536, %v1141
        %1144 = vbcast.lane.b32.xlu0 %v1142, 256
        %v1145 = vpop.permute.xlu0 %1144
        %v1146 = vlaneseq
        %v1147 = vshrl.u32 %v1146, 7
        %v1148 = vsub.s32 1, %v1147
        %v1149 = vrot.slane %v536, %v1148
        %1151 = vbcast.lane.b32.xlu0 %v1149, 256
        %v1152 = vpop.permute.xlu0 %1151
        %v1153 = vlaneseq
        %v1154 = vshrl.u32 %v1153, 7
        %v1155 = vsub.s32 2, %v1154
        %v1156 = vrot.slane %v536, %v1155
        %1158 = vbcast.lane.b32.xlu0 %v1156, 256
        %v1159 = vpop.permute.xlu0 %1158
        %v1160 = vlaneseq
        %v1161 = vshrl.u32 %v1160, 7
        %v1162 = vsub.s32 3, %v1161
        %v1163 = vrot.slane %v536, %v1162
        %1165 = vbcast.lane.b32.xlu0 %v1163, 256
        %v1166 = vpop.permute.xlu0 %1165
        %v1167 = vlaneseq
        %v1168 = vshrl.u32 %v1167, 7
        %v1169 = vsub.s32 4, %v1168
        %v1170 = vrot.slane %v536, %v1169
        %1172 = vbcast.lane.b32.xlu0 %v1170, 256
        %v1173 = vpop.permute.xlu0 %1172
        %v1174 = vlaneseq
        %v1175 = vshrl.u32 %v1174, 7
        %v1176 = vsub.s32 5, %v1175
        %v1177 = vrot.slane %v536, %v1176
        %1179 = vbcast.lane.b32.xlu0 %v1177, 256
        %v1180 = vpop.permute.xlu0 %1179
        %v1181 = vlaneseq
        %v1182 = vshrl.u32 %v1181, 7
        %v1183 = vsub.s32 6, %v1182
        %v1184 = vrot.slane %v536, %v1183
        %1186 = vbcast.lane.b32.xlu0 %v1184, 256
        %v1187 = vpop.permute.xlu0 %1186
        %v1188 = vlaneseq
        %v1189 = vshrl.u32 %v1188, 7
        %v1190 = vsub.s32 7, %v1189
        %v1191 = vrot.slane %v536, %v1190
        %1193 = vbcast.lane.b32.xlu0 %v1191, 256
        %v1194 = vpop.permute.xlu0 %1193
        %v1195 = vlaneseq
        %v1196 = vshrl.u32 %v1195, 7
        %v1197 = vsub.s32 0, %v1196
        %v1198 = vrot.slane %v612, %v1197
        %1200 = vbcast.lane.b32.xlu0 %v1198, 256
        %v1201 = vpop.permute.xlu0 %1200
        %v1202 = vlaneseq
        %v1203 = vshrl.u32 %v1202, 7
        %v1204 = vsub.s32 1, %v1203
        %v1205 = vrot.slane %v612, %v1204
        %1207 = vbcast.lane.b32.xlu0 %v1205, 256
        %v1208 = vpop.permute.xlu0 %1207
        %v1209 = vlaneseq
        %v1210 = vshrl.u32 %v1209, 7
        %v1211 = vsub.s32 2, %v1210
        %v1212 = vrot.slane %v612, %v1211
        %1214 = vbcast.lane.b32.xlu0 %v1212, 256
        %v1215 = vpop.permute.xlu0 %1214
        %v1216 = vlaneseq
        %v1217 = vshrl.u32 %v1216, 7
        %v1218 = vsub.s32 3, %v1217
        %v1219 = vrot.slane %v612, %v1218
        %1221 = vbcast.lane.b32.xlu0 %v1219, 256
        %v1222 = vpop.permute.xlu0 %1221
        %v1223 = vlaneseq
        %v1224 = vshrl.u32 %v1223, 7
        %v1225 = vsub.s32 4, %v1224
        %v1226 = vrot.slane %v612, %v1225
        %1228 = vbcast.lane.b32.xlu0 %v1226, 256
        %v1229 = vpop.permute.xlu0 %1228
        %v1230 = vlaneseq
        %v1231 = vshrl.u32 %v1230, 7
        %v1232 = vsub.s32 5, %v1231
        %v1233 = vrot.slane %v612, %v1232
        %1235 = vbcast.lane.b32.xlu0 %v1233, 256
        %v1236 = vpop.permute.xlu0 %1235
        %v1237 = vlaneseq
        %v1238 = vshrl.u32 %v1237, 7
        %v1239 = vsub.s32 6, %v1238
        %v1240 = vrot.slane %v612, %v1239
        %1242 = vbcast.lane.b32.xlu0 %v1240, 256
        %v1243 = vpop.permute.xlu0 %1242
        %v1244 = vlaneseq
        %v1245 = vshrl.u32 %v1244, 7
        %v1246 = vsub.s32 7, %v1245
        %v1247 = vrot.slane %v612, %v1246
        %1249 = vbcast.lane.b32.xlu0 %v1247, 256
        %v1250 = vpop.permute.xlu0 %1249
        %v1251 = vlaneseq
        %v1252 = vshrl.u32 %v1251, 7
        %v1253 = vsub.s32 0, %v1252
        %v1254 = vrot.slane %v644, %v1253
        %v1255 = vlaneseq
        %v1256 = vshrl.u32 %v1255, 7
        %v1257 = vsub.s32 0, %v1256
        %v1258 = vrot.slane %v658, %v1257
        %v1259 = vlaneseq
        %v1260 = vshrl.u32 %v1259, 7
        %v1261 = vsub.s32 0, %v1260
        %v1262 = vrot.slane %v666, %v1261
        %v1263 = vlaneseq
        %v1264 = vshrl.u32 %v1263, 7
        %v1265 = vsub.s32 0, %v1264
        %v1266 = vrot.slane %v668, %v1265
        %v1267 = vlaneseq
        %v1268 = vshrl.u32 %v1267, 7
        %v1269 = vsub.s32 0, %v1268
        %v1270 = vrot.slane %v651, %v1269
        %v1271 = vlaneseq
        %v1272 = vshrl.u32 %v1271, 7
        %v1273 = vsub.s32 0, %v1272
        %v1274 = vrot.slane %v665, %v1273
        %v1275 = vlaneseq
        %v1276 = vshrl.u32 %v1275, 7
        %v1277 = vsub.s32 0, %v1276
        %v1278 = vrot.slane %v667, %v1277
        %v1279 = vlaneseq
        %v1280 = vshrl.u32 %v1279, 7
        %v1281 = vsub.s32 0, %v1280
        %v1282 = vrot.slane %v669, %v1281
        %v1283 = vlaneseq
        %v1284 = vshrl.u32 %v1283, 7
        %v1285 = vsub.s32 0, %v1284
        %v1286 = vrot.slane %v693, %v1285
        %v1287 = vlaneseq
        %v1288 = vshrl.u32 %v1287, 7
        %v1289 = vsub.s32 0, %v1288
        %v1290 = vrot.slane %v707, %v1289
        %v1291 = vlaneseq
        %v1292 = vshrl.u32 %v1291, 7
        %v1293 = vsub.s32 0, %v1292
        %v1294 = vrot.slane %v715, %v1293
        %v1295 = vlaneseq
        %v1296 = vshrl.u32 %v1295, 7
        %v1297 = vsub.s32 0, %v1296
        %v1298 = vrot.slane %v717, %v1297
        %v1299 = vlaneseq
        %v1300 = vshrl.u32 %v1299, 7
        %v1301 = vsub.s32 0, %v1300
        %v1302 = vrot.slane %v700, %v1301
        %v1303 = vlaneseq
        %v1304 = vshrl.u32 %v1303, 7
        %v1305 = vsub.s32 0, %v1304
        %v1306 = vrot.slane %v714, %v1305
        %v1307 = vlaneseq
        %v1308 = vshrl.u32 %v1307, 7
        %v1309 = vsub.s32 0, %v1308
        %v1310 = vrot.slane %v716, %v1309
        %v1311 = vlaneseq
        %v1312 = vshrl.u32 %v1311, 7
        %v1313 = vsub.s32 0, %v1312
        %v1314 = vrot.slane %v718, %v1313
        %v1315 = vlaneseq
        %v1316 = vshrl.u32 %v1315, 7
        %v1317 = vsub.s32 0, %v1316
        %v1318 = vrot.slane %v742, %v1317
        %v1319 = vlaneseq
        %v1320 = vshrl.u32 %v1319, 7
        %v1321 = vsub.s32 0, %v1320
        %v1322 = vrot.slane %v756, %v1321
        %v1323 = vlaneseq
        %v1324 = vshrl.u32 %v1323, 7
        %v1325 = vsub.s32 0, %v1324
        %v1326 = vrot.slane %v764, %v1325
        %v1327 = vlaneseq
        %v1328 = vshrl.u32 %v1327, 7
        %v1329 = vsub.s32 0, %v1328
        %v1330 = vrot.slane %v766, %v1329
        %v1331 = vlaneseq
        %v1332 = vshrl.u32 %v1331, 7
        %v1333 = vsub.s32 0, %v1332
        %v1334 = vrot.slane %v749, %v1333
        %v1335 = vlaneseq
        %v1336 = vshrl.u32 %v1335, 7
        %v1337 = vsub.s32 0, %v1336
        %v1338 = vrot.slane %v763, %v1337
        %v1339 = vlaneseq
        %v1340 = vshrl.u32 %v1339, 7
        %v1341 = vsub.s32 0, %v1340
        %v1342 = vrot.slane %v765, %v1341
        %v1343 = vlaneseq
        %v1344 = vshrl.u32 %v1343, 7
        %v1345 = vsub.s32 0, %v1344
        %v1346 = vrot.slane %v767, %v1345
        %v1347 = vlaneseq
        %v1348 = vshrl.u32 %v1347, 7
        %v1349 = vsub.s32 0, %v1348
        %v1350 = vrot.slane %v791, %v1349
        %v1351 = vlaneseq
        %v1352 = vshrl.u32 %v1351, 7
        %v1353 = vsub.s32 0, %v1352
        %v1354 = vrot.slane %v805, %v1353
        %v1355 = vlaneseq
        %v1356 = vshrl.u32 %v1355, 7
        %v1357 = vsub.s32 0, %v1356
        %v1358 = vrot.slane %v813, %v1357
        %v1359 = vlaneseq
        %v1360 = vshrl.u32 %v1359, 7
        %v1361 = vsub.s32 0, %v1360
        %v1362 = vrot.slane %v815, %v1361
        %v1363 = vlaneseq
        %v1364 = vshrl.u32 %v1363, 7
        %v1365 = vsub.s32 0, %v1364
        %v1366 = vrot.slane %v798, %v1365
        %v1367 = vlaneseq
        %v1368 = vshrl.u32 %v1367, 7
        %v1369 = vsub.s32 0, %v1368
        %v1370 = vrot.slane %v812, %v1369
        %v1371 = vlaneseq
        %v1372 = vshrl.u32 %v1371, 7
        %v1373 = vsub.s32 0, %v1372
        %v1374 = vrot.slane %v814, %v1373
        %v1375 = vlaneseq
        %v1376 = vshrl.u32 %v1375, 7
        %v1377 = vsub.s32 0, %v1376
        %v1378 = vrot.slane %v816, %v1377
        %v1379 = vlaneseq
        %v1380 = vshrl.u32 %v1379, 7
        %v1381 = vsub.s32 0, %v1380
        %v1382 = vrot.slane %v840, %v1381
        %v1383 = vlaneseq
        %v1384 = vshrl.u32 %v1383, 7
        %v1385 = vsub.s32 0, %v1384
        %v1386 = vrot.slane %v854, %v1385
        %v1387 = vlaneseq
        %v1388 = vshrl.u32 %v1387, 7
        %v1389 = vsub.s32 0, %v1388
        %v1390 = vrot.slane %v862, %v1389
        %v1391 = vlaneseq
        %v1392 = vshrl.u32 %v1391, 7
        %v1393 = vsub.s32 0, %v1392
        %v1394 = vrot.slane %v864, %v1393
        %v1395 = vlaneseq
        %v1396 = vshrl.u32 %v1395, 7
        %v1397 = vsub.s32 0, %v1396
        %v1398 = vrot.slane %v847, %v1397
        %v1399 = vlaneseq
        %v1400 = vshrl.u32 %v1399, 7
        %v1401 = vsub.s32 0, %v1400
        %v1402 = vrot.slane %v861, %v1401
        %v1403 = vlaneseq
        %v1404 = vshrl.u32 %v1403, 7
        %v1405 = vsub.s32 0, %v1404
        %v1406 = vrot.slane %v863, %v1405
        %v1407 = vlaneseq
        %v1408 = vshrl.u32 %v1407, 7
        %v1409 = vsub.s32 0, %v1408
        %v1410 = vrot.slane %v865, %v1409
        %v1411 = vlaneseq
        %v1412 = vshrl.u32 %v1411, 7
        %v1413 = vsub.s32 0, %v1412
        %v1414 = vrot.slane %v889, %v1413
        %v1415 = vlaneseq
        %v1416 = vshrl.u32 %v1415, 7
        %v1417 = vsub.s32 0, %v1416
        %v1418 = vrot.slane %v903, %v1417
        %v1419 = vlaneseq
        %v1420 = vshrl.u32 %v1419, 7
        %v1421 = vsub.s32 0, %v1420
        %v1422 = vrot.slane %v911, %v1421
        %v1423 = vlaneseq
        %v1424 = vshrl.u32 %v1423, 7
        %v1425 = vsub.s32 0, %v1424
        %v1426 = vrot.slane %v913, %v1425
        %v1427 = vlaneseq
        %v1428 = vshrl.u32 %v1427, 7
        %v1429 = vsub.s32 0, %v1428
        %v1430 = vrot.slane %v896, %v1429
        %v1431 = vlaneseq
        %v1432 = vshrl.u32 %v1431, 7
        %v1433 = vsub.s32 0, %v1432
        %v1434 = vrot.slane %v910, %v1433
        %v1435 = vlaneseq
        %v1436 = vshrl.u32 %v1435, 7
        %v1437 = vsub.s32 0, %v1436
        %v1438 = vrot.slane %v912, %v1437
        %v1439 = vlaneseq
        %v1440 = vshrl.u32 %v1439, 7
        %v1441 = vsub.s32 0, %v1440
        %v1442 = vrot.slane %v914, %v1441
        %v1491 = vsub.f32 %v1254, %v921
        %v1492 = vsub.f32 %v1258, %v928
        %v1493 = vsub.f32 %v1262, %v935
        %v1494 = vsub.f32 %v1266, %v942
        %v1495 = vsub.f32 %v1270, %v949
        %v1496 = vsub.f32 %v1274, %v956
        %v1497 = vsub.f32 %v1278, %v963
        %v1498 = vsub.f32 %v1282, %v970
        %v1499 = vsub.f32 %v1286, %v977
        %v1500 = vsub.f32 %v1290, %v984
        %v1501 = vsub.f32 %v1294, %v991
        %v1502 = vsub.f32 %v1298, %v998
        %v1503 = vsub.f32 %v1302, %v1005
        %v1504 = vsub.f32 %v1306, %v1012
        %v1505 = vsub.f32 %v1310, %v1019
        %v1506 = vsub.f32 %v1314, %v1026
        %v1507 = vsub.f32 %v1318, %v1033
        %v1508 = vsub.f32 %v1322, %v1040
        %v1509 = vsub.f32 %v1326, %v1047
        %v1510 = vsub.f32 %v1330, %v1054
        %v1511 = vsub.f32 %v1334, %v1061
        %v1512 = vsub.f32 %v1338, %v1068
        %v1513 = vsub.f32 %v1342, %v1075
        %v1514 = vsub.f32 %v1346, %v1082
        %v1515 = vsub.f32 %v1350, %v1089
        %v1516 = vsub.f32 %v1354, %v1096
        %v1517 = vsub.f32 %v1358, %v1103
        %v1518 = vsub.f32 %v1362, %v1110
        %v1519 = vsub.f32 %v1366, %v1117
        %v1520 = vsub.f32 %v1370, %v1124
        %v1521 = vsub.f32 %v1374, %v1131
        %v1522 = vsub.f32 %v1378, %v1138
        %v1523 = vsub.f32 %v1382, %v1145
        %v1524 = vsub.f32 %v1386, %v1152
        %v1525 = vsub.f32 %v1390, %v1159
        %v1526 = vsub.f32 %v1394, %v1166
        %v1527 = vsub.f32 %v1398, %v1173
        %v1528 = vsub.f32 %v1402, %v1180
        %v1529 = vsub.f32 %v1406, %v1187
        %v1530 = vsub.f32 %v1410, %v1194
        %v1531 = vsub.f32 %v1414, %v1201
        %v1532 = vsub.f32 %v1418, %v1208
        %v1533 = vsub.f32 %v1422, %v1215
        %v1534 = vsub.f32 %v1426, %v1222
        %v1535 = vsub.f32 %v1430, %v1229
        %v1536 = vsub.f32 %v1434, %v1236
        %v1537 = vsub.f32 %v1438, %v1243
        %v1538 = vsub.f32 %v1442, %v1250
        %v1539 = vtanh.pop %v1491
        %v1540 = vtanh.pop %v1492
        %v1541 = vtanh.pop %v1493
        %v1542 = vtanh.pop %v1494
        %v1543 = vtanh.pop %v1495
        %v1544 = vtanh.pop %v1496
        %v1545 = vtanh.pop %v1497
        %v1546 = vtanh.pop %v1498
        %v1547 = vtanh.pop %v1499
        %v1548 = vtanh.pop %v1500
        %v1549 = vtanh.pop %v1501
        %v1550 = vtanh.pop %v1502
        %v1551 = vtanh.pop %v1503
        %v1552 = vtanh.pop %v1504
        %v1553 = vtanh.pop %v1505
        %v1554 = vtanh.pop %v1506
        %v1555 = vtanh.pop %v1507
        %v1556 = vtanh.pop %v1508
        %v1557 = vtanh.pop %v1509
        %v1558 = vtanh.pop %v1510
        %v1559 = vtanh.pop %v1511
        %v1560 = vtanh.pop %v1512
        %v1561 = vtanh.pop %v1513
        %v1562 = vtanh.pop %v1514
        %v1563 = vtanh.pop %v1515
        %v1564 = vtanh.pop %v1516
        %v1565 = vtanh.pop %v1517
        %v1566 = vtanh.pop %v1518
        %v1567 = vtanh.pop %v1519
        %v1568 = vtanh.pop %v1520
        %v1569 = vtanh.pop %v1521
        %v1570 = vtanh.pop %v1522
        %v1571 = vtanh.pop %v1523
        %v1572 = vtanh.pop %v1524
        %v1573 = vtanh.pop %v1525
        %v1574 = vtanh.pop %v1526
        %v1575 = vtanh.pop %v1527
        %v1576 = vtanh.pop %v1528
        %v1577 = vtanh.pop %v1529
        %v1578 = vtanh.pop %v1530
        %v1579 = vtanh.pop %v1531
        %v1580 = vtanh.pop %v1532
        %v1581 = vtanh.pop %v1533
        %v1582 = vtanh.pop %v1534
        %v1583 = vtanh.pop %v1535
        %v1584 = vtanh.pop %v1536
        %v1585 = vtanh.pop %v1537
        %v1586 = vtanh.pop %v1538
        %vm1587 = vcmask 64512
        %v1588 = vsel %vm1587, %v1539, 0.0
        %1589 = vadd.xlane.f32.xlu0 %v1588
        %v1590 = vpop.xlane.xlu0 %1589
        %v1591 = vsel %vm1587, %v1540, 0.0
        %1592 = vadd.xlane.f32.xlu0 %v1591
        %v1593 = vpop.xlane.xlu0 %1592
        %v1594 = vsel %vm1587, %v1541, 0.0
        %1595 = vadd.xlane.f32.xlu0 %v1594
        %v1596 = vpop.xlane.xlu0 %1595
        %v1597 = vsel %vm1587, %v1542, 0.0
        %1598 = vadd.xlane.f32.xlu0 %v1597
        %v1599 = vpop.xlane.xlu0 %1598
        %v1600 = vsel %vm1587, %v1543, 0.0
        %1601 = vadd.xlane.f32.xlu0 %v1600
        %v1602 = vpop.xlane.xlu0 %1601
        %v1603 = vsel %vm1587, %v1544, 0.0
        %1604 = vadd.xlane.f32.xlu0 %v1603
        %v1605 = vpop.xlane.xlu0 %1604
        %v1606 = vsel %vm1587, %v1545, 0.0
        %1607 = vadd.xlane.f32.xlu0 %v1606
        %v1608 = vpop.xlane.xlu0 %1607
        %v1609 = vsel %vm1587, %v1546, 0.0
        %1610 = vadd.xlane.f32.xlu0 %v1609
        %v1611 = vpop.xlane.xlu0 %1610
        %v1612 = vsel %vm1587, %v1547, 0.0
        %1613 = vadd.xlane.f32.xlu0 %v1612
        %v1614 = vpop.xlane.xlu0 %1613
        %v1615 = vsel %vm1587, %v1548, 0.0
        %1616 = vadd.xlane.f32.xlu0 %v1615
        %v1617 = vpop.xlane.xlu0 %1616
        %v1618 = vsel %vm1587, %v1549, 0.0
        %1619 = vadd.xlane.f32.xlu0 %v1618
        %v1620 = vpop.xlane.xlu0 %1619
        %v1621 = vsel %vm1587, %v1550, 0.0
        %1622 = vadd.xlane.f32.xlu0 %v1621
        %v1623 = vpop.xlane.xlu0 %1622
        %v1624 = vsel %vm1587, %v1551, 0.0
        %1625 = vadd.xlane.f32.xlu0 %v1624
        %v1626 = vpop.xlane.xlu0 %1625
        %v1627 = vsel %vm1587, %v1552, 0.0
        %1628 = vadd.xlane.f32.xlu0 %v1627
        %v1629 = vpop.xlane.xlu0 %1628
        %v1630 = vsel %vm1587, %v1553, 0.0
        %1631 = vadd.xlane.f32.xlu0 %v1630
        %v1632 = vpop.xlane.xlu0 %1631
        %v1633 = vsel %vm1587, %v1554, 0.0
        %1634 = vadd.xlane.f32.xlu0 %v1633
        %v1635 = vpop.xlane.xlu0 %1634
        %v1636 = vsel %vm1587, %v1555, 0.0
        %1637 = vadd.xlane.f32.xlu0 %v1636
        %v1638 = vpop.xlane.xlu0 %1637
        %v1639 = vsel %vm1587, %v1556, 0.0
        %1640 = vadd.xlane.f32.xlu0 %v1639
        %v1641 = vpop.xlane.xlu0 %1640
        %v1642 = vsel %vm1587, %v1557, 0.0
        %1643 = vadd.xlane.f32.xlu0 %v1642
        %v1644 = vpop.xlane.xlu0 %1643
        %v1645 = vsel %vm1587, %v1558, 0.0
        %1646 = vadd.xlane.f32.xlu0 %v1645
        %v1647 = vpop.xlane.xlu0 %1646
        %v1648 = vsel %vm1587, %v1559, 0.0
        %1649 = vadd.xlane.f32.xlu0 %v1648
        %v1650 = vpop.xlane.xlu0 %1649
        %v1651 = vsel %vm1587, %v1560, 0.0
        %1652 = vadd.xlane.f32.xlu0 %v1651
        %v1653 = vpop.xlane.xlu0 %1652
        %v1654 = vsel %vm1587, %v1561, 0.0
        %1655 = vadd.xlane.f32.xlu0 %v1654
        %v1656 = vpop.xlane.xlu0 %1655
        %v1657 = vsel %vm1587, %v1562, 0.0
        %1658 = vadd.xlane.f32.xlu0 %v1657
        %v1659 = vpop.xlane.xlu0 %1658
        %v1660 = vsel %vm1587, %v1563, 0.0
        %1661 = vadd.xlane.f32.xlu0 %v1660
        %v1662 = vpop.xlane.xlu0 %1661
        %v1663 = vsel %vm1587, %v1564, 0.0
        %1664 = vadd.xlane.f32.xlu0 %v1663
        %v1665 = vpop.xlane.xlu0 %1664
        %v1666 = vsel %vm1587, %v1565, 0.0
        %1667 = vadd.xlane.f32.xlu0 %v1666
        %v1668 = vpop.xlane.xlu0 %1667
        %v1669 = vsel %vm1587, %v1566, 0.0
        %1670 = vadd.xlane.f32.xlu0 %v1669
        %v1671 = vpop.xlane.xlu0 %1670
        %v1672 = vsel %vm1587, %v1567, 0.0
        %1673 = vadd.xlane.f32.xlu0 %v1672
        %v1674 = vpop.xlane.xlu0 %1673
        %v1675 = vsel %vm1587, %v1568, 0.0
        %1676 = vadd.xlane.f32.xlu0 %v1675
        %v1677 = vpop.xlane.xlu0 %1676
        %v1678 = vsel %vm1587, %v1569, 0.0
        %1679 = vadd.xlane.f32.xlu0 %v1678
        %v1680 = vpop.xlane.xlu0 %1679
        %v1681 = vsel %vm1587, %v1570, 0.0
        %1682 = vadd.xlane.f32.xlu0 %v1681
        %v1683 = vpop.xlane.xlu0 %1682
        %v1684 = vsel %vm1587, %v1571, 0.0
        %1685 = vadd.xlane.f32.xlu0 %v1684
        %v1686 = vpop.xlane.xlu0 %1685
        %v1687 = vsel %vm1587, %v1572, 0.0
        %1688 = vadd.xlane.f32.xlu0 %v1687
        %v1689 = vpop.xlane.xlu0 %1688
        %v1690 = vsel %vm1587, %v1573, 0.0
        %1691 = vadd.xlane.f32.xlu0 %v1690
        %v1692 = vpop.xlane.xlu0 %1691
        %v1693 = vsel %vm1587, %v1574, 0.0
        %1694 = vadd.xlane.f32.xlu0 %v1693
        %v1695 = vpop.xlane.xlu0 %1694
        %v1696 = vsel %vm1587, %v1575, 0.0
        %1697 = vadd.xlane.f32.xlu0 %v1696
        %v1698 = vpop.xlane.xlu0 %1697
        %v1699 = vsel %vm1587, %v1576, 0.0
        %1700 = vadd.xlane.f32.xlu0 %v1699
        %v1701 = vpop.xlane.xlu0 %1700
        %v1702 = vsel %vm1587, %v1577, 0.0
        %1703 = vadd.xlane.f32.xlu0 %v1702
        %v1704 = vpop.xlane.xlu0 %1703
        %v1705 = vsel %vm1587, %v1578, 0.0
        %1706 = vadd.xlane.f32.xlu0 %v1705
        %v1707 = vpop.xlane.xlu0 %1706
        %v1708 = vsel %vm1587, %v1579, 0.0
        %1709 = vadd.xlane.f32.xlu0 %v1708
        %v1710 = vpop.xlane.xlu0 %1709
        %v1711 = vsel %vm1587, %v1580, 0.0
        %1712 = vadd.xlane.f32.xlu0 %v1711
        %v1713 = vpop.xlane.xlu0 %1712
        %v1714 = vsel %vm1587, %v1581, 0.0
        %1715 = vadd.xlane.f32.xlu0 %v1714
        %v1716 = vpop.xlane.xlu0 %1715
        %v1717 = vsel %vm1587, %v1582, 0.0
        %1718 = vadd.xlane.f32.xlu0 %v1717
        %v1719 = vpop.xlane.xlu0 %1718
        %v1720 = vsel %vm1587, %v1583, 0.0
        %1721 = vadd.xlane.f32.xlu0 %v1720
        %v1722 = vpop.xlane.xlu0 %1721
        %v1723 = vsel %vm1587, %v1584, 0.0
        %1724 = vadd.xlane.f32.xlu0 %v1723
        %v1725 = vpop.xlane.xlu0 %1724
        %v1726 = vsel %vm1587, %v1585, 0.0
        %1727 = vadd.xlane.f32.xlu0 %v1726
        %v1728 = vpop.xlane.xlu0 %1727
        %v1729 = vsel %vm1587, %v1586, 0.0
        %1730 = vadd.xlane.f32.xlu0 %v1729
        %v1731 = vpop.xlane.xlu0 %1730
        %v1732 = vadd.f32 %v1590, 8.0
        %v1733 = vadd.f32 %v1593, 8.0
        %v1734 = vadd.f32 %v1596, 8.0
        %v1735 = vadd.f32 %v1599, 8.0
        %v1736 = vadd.f32 %v1602, 8.0
        %v1737 = vadd.f32 %v1605, 8.0
        %v1738 = vadd.f32 %v1608, 8.0
        %v1739 = vadd.f32 %v1611, 8.0
        %v1740 = vadd.f32 %v1614, 8.0
        %v1741 = vadd.f32 %v1617, 8.0
        %v1742 = vadd.f32 %v1620, 8.0
        %v1743 = vadd.f32 %v1623, 8.0
        %v1744 = vadd.f32 %v1626, 8.0
        %v1745 = vadd.f32 %v1629, 8.0
        %v1746 = vadd.f32 %v1632, 8.0
        %v1747 = vadd.f32 %v1635, 8.0
        %v1748 = vadd.f32 %v1638, 8.0
        %v1749 = vadd.f32 %v1641, 8.0
        %v1750 = vadd.f32 %v1644, 8.0
        %v1751 = vadd.f32 %v1647, 8.0
        %v1752 = vadd.f32 %v1650, 8.0
        %v1753 = vadd.f32 %v1653, 8.0
        %v1754 = vadd.f32 %v1656, 8.0
        %v1755 = vadd.f32 %v1659, 8.0
        %v1756 = vadd.f32 %v1662, 8.0
        %v1757 = vadd.f32 %v1665, 8.0
        %v1758 = vadd.f32 %v1668, 8.0
        %v1759 = vadd.f32 %v1671, 8.0
        %v1760 = vadd.f32 %v1674, 8.0
        %v1761 = vadd.f32 %v1677, 8.0
        %v1762 = vadd.f32 %v1680, 8.0
        %v1763 = vadd.f32 %v1683, 8.0
        %v1764 = vadd.f32 %v1686, 8.0
        %v1765 = vadd.f32 %v1689, 8.0
        %v1766 = vadd.f32 %v1692, 8.0
        %v1767 = vadd.f32 %v1695, 8.0
        %v1768 = vadd.f32 %v1698, 8.0
        %v1769 = vadd.f32 %v1701, 8.0
        %v1770 = vadd.f32 %v1704, 8.0
        %v1771 = vadd.f32 %v1707, 8.0
        %v1772 = vadd.f32 %v1710, 8.0
        %v1773 = vadd.f32 %v1713, 8.0
        %v1774 = vadd.f32 %v1716, 8.0
        %v1775 = vadd.f32 %v1719, 8.0
        %v1776 = vadd.f32 %v1722, 8.0
        %v1777 = vadd.f32 %v1725, 8.0
        %v1778 = vadd.f32 %v1728, 8.0
        %v1779 = vadd.f32 %v1731, 8.0
        %v1780 = vmul.f32 %v1732, 0.5
        %v1781 = vmul.f32 %v1733, 0.5
        %v1782 = vmul.f32 %v1734, 0.5
        %v1783 = vmul.f32 %v1735, 0.5
        %v1784 = vmul.f32 %v1736, 0.5
        %v1785 = vmul.f32 %v1737, 0.5
        %v1786 = vmul.f32 %v1738, 0.5
        %v1787 = vmul.f32 %v1739, 0.5
        %v1788 = vmul.f32 %v1740, 0.5
        %v1789 = vmul.f32 %v1741, 0.5
        %v1790 = vmul.f32 %v1742, 0.5
        %v1791 = vmul.f32 %v1743, 0.5
        %v1792 = vmul.f32 %v1744, 0.5
        %v1793 = vmul.f32 %v1745, 0.5
        %v1794 = vmul.f32 %v1746, 0.5
        %v1795 = vmul.f32 %v1747, 0.5
        %v1796 = vmul.f32 %v1748, 0.5
        %v1797 = vmul.f32 %v1749, 0.5
        %v1798 = vmul.f32 %v1750, 0.5
        %v1799 = vmul.f32 %v1751, 0.5
        %v1800 = vmul.f32 %v1752, 0.5
        %v1801 = vmul.f32 %v1753, 0.5
        %v1802 = vmul.f32 %v1754, 0.5
        %v1803 = vmul.f32 %v1755, 0.5
        %v1804 = vmul.f32 %v1756, 0.5
        %v1805 = vmul.f32 %v1757, 0.5
        %v1806 = vmul.f32 %v1758, 0.5
        %v1807 = vmul.f32 %v1759, 0.5
        %v1808 = vmul.f32 %v1760, 0.5
        %v1809 = vmul.f32 %v1761, 0.5
        %v1810 = vmul.f32 %v1762, 0.5
        %v1811 = vmul.f32 %v1763, 0.5
        %v1812 = vmul.f32 %v1764, 0.5
        %v1813 = vmul.f32 %v1765, 0.5
        %v1814 = vmul.f32 %v1766, 0.5
        %v1815 = vmul.f32 %v1767, 0.5
        %v1816 = vmul.f32 %v1768, 0.5
        %v1817 = vmul.f32 %v1769, 0.5
        %v1818 = vmul.f32 %v1770, 0.5
        %v1819 = vmul.f32 %v1771, 0.5
        %v1820 = vmul.f32 %v1772, 0.5
        %v1821 = vmul.f32 %v1773, 0.5
        %v1822 = vmul.f32 %v1774, 0.5
        %v1823 = vmul.f32 %v1775, 0.5
        %v1824 = vmul.f32 %v1776, 0.5
        %v1825 = vmul.f32 %v1777, 0.5
        %v1826 = vmul.f32 %v1778, 0.5
        %v1827 = vmul.f32 %v1779, 0.5
        %v1828 = vld [vmem:[%s1] sm:$0xff]
        %v1829 = vld [vmem:[%s1 + $0x8] sm:$0xff]
        %v1830 = vld [vmem:[%s1 + $0x10] sm:$0xff]
        %v1831 = vld [vmem:[%s1 + $0x18] sm:$0xff]
        %v1832 = vld [vmem:[%s1 + $0x20] sm:$0xff]
        %v1833 = vld [vmem:[%s1 + $0x28] sm:$0xff]
        %v1834 = vld [vmem:[%s1 + $0x30] sm:$0xff]
        %v1835 = vld [vmem:[%s1 + $0x38] sm:$0xff]
        %v1836 = vld [vmem:[%s1 + $0x40] sm:$0xff]
        %v1837 = vld [vmem:[%s1 + $0x48] sm:$0xff]
        %v1838 = vld [vmem:[%s1 + $0x50] sm:$0xff]
        %v1839 = vld [vmem:[%s1 + $0x58] sm:$0xff]
        %v1841 = vsel %vm158, %v1828, 0
        %v1844 = vsel %vm158, %v1829, 0
        %v1847 = vsel %vm158, %v1830, 0
        %v1850 = vsel %vm158, %v1831, 0
        %v1853 = vsel %vm158, %v1832, 0
        %v1856 = vsel %vm158, %v1833, 0
        %v1859 = vsel %vm158, %v1834, 0
        %v1862 = vsel %vm158, %v1835, 0
        %v1865 = vsel %vm158, %v1836, 0
        %v1868 = vsel %vm158, %v1837, 0
        %v1871 = vsel %vm158, %v1838, 0
        %v1874 = vsel %vm158, %v1839, 0
        %1876 = vmatprep.subr.mxu0 0.0
        %1877 = vmatpush1.xpose.msra.mxu0 %v1841
        %1878 = vmatprep.subr.mxu0 0.0
        %1879 = vmatpush1.xpose.msra.mxu0 %v1844
        %1880 = vmatprep.subr.mxu0 0.0
        %1881 = vmatpush1.xpose.msra.mxu0 %v1847
        %1882 = vmatprep.subr.mxu0 0.0
        %1883 = vmatpush1.xpose.msra.mxu0 %v1850
        %1884 = vmatprep.subr.mxu0 0.0
        %1885 = vmatpush1.xpose.msra.mxu0 %v1853
        %1886 = vmatprep.subr.mxu0 0.0
        %1887 = vmatpush1.xpose.msra.mxu0 %v1856
        %1888 = vmatprep.subr.mxu0 0.0
        %1889 = vmatpush1.xpose.msra.mxu0 %v1859
        %1890 = vmatprep.subr.mxu0 0.0
        %1891 = vmatpush1.xpose.msra.mxu0 %v1862
        %1892 = vmatprep.subr.mxu0 0.0
        %1893 = vmatpush1.xpose.msra.mxu0 %v1865
        %1894 = vmatprep.subr.mxu0 0.0
        %1895 = vmatpush1.xpose.msra.mxu0 %v1868
        %1896 = vmatprep.subr.mxu0 0.0
        %1897 = vmatpush1.xpose.msra.mxu0 %v1871
        %1898 = vmatprep.subr.mxu0 0.0
        %1899 = vmatpush1.xpose.msra.mxu0 %v1874
        %1900 = vmatprep.subr.mxu0 0.0
        %1901 = vmatpush1.xpose.msra.mxu0 0.0
        %1902 = vmatprep.subr.mxu0 0.0
        %1903 = vmatpush1.xpose.msra.mxu0 0.0
        %1904 = vmatprep.subr.mxu0 0.0
        %1905 = vmatpush1.xpose.msra.mxu0 0.0
        %1906 = vmatprep.subr.mxu0 0.0
        %1907 = vmatpush1.xpose.msra.mxu0 0.0
        %1908 = vmatprep.subr.mxu0 0.0
        %1909 = vmatpush1.xpose.msra.mxu0 0.0
        %1910 = vmatprep.subr.mxu0 0.0
        %1911 = vmatpush1.xpose.msra.mxu0 0.0
        %1912 = vmatprep.subr.mxu0 0.0
        %1913 = vmatpush1.xpose.msra.mxu0 0.0
        %1914 = vmatprep.subr.mxu0 0.0
        %1915 = vmatpush1.xpose.msra.mxu0 0.0
        %1916 = vmatprep.subr.mxu0 0.0
        %1917 = vmatpush1.xpose.msra.mxu0 0.0
        %1918 = vmatprep.subr.mxu0 0.0
        %1919 = vmatpush1.xpose.msra.mxu0 0.0
        %1920 = vmatprep.subr.mxu0 0.0
        %1921 = vmatpush1.xpose.msra.mxu0 0.0
        %1922 = vmatprep.subr.mxu0 0.0
        %1923 = vmatpush1.xpose.msra.mxu0 0.0
        %1924 = vmatprep.subr.mxu0 0.0
        %1925 = vmatpush1.xpose.msra.mxu0 0.0
        %1926 = vmatprep.subr.mxu0 0.0
        %1927 = vmatpush1.xpose.msra.mxu0 0.0
        %1928 = vmatprep.subr.mxu0 0.0
        %1929 = vmatpush1.xpose.msra.mxu0 0.0
        %1930 = vmatprep.subr.mxu0 0.0
        %1931 = vmatpush1.xpose.msra.mxu0 0.0
        %1932 = vmatprep.subr.mxu0 0.0
        %1933 = vmatpush1.xpose.msra.mxu0 0.0
        %1934 = vmatprep.subr.mxu0 0.0
        %1935 = vmatpush1.xpose.msra.mxu0 0.0
        %1936 = vmatprep.subr.mxu0 0.0
        %1937 = vmatpush1.xpose.msra.mxu0 0.0
        %1938 = vmatprep.subr.mxu0 0.0
        %1939 = vmatpush1.xpose.msra.mxu0 0.0
        %1940 = vmatprep.mubr.f32.mxu0 0.0
        %1941 = vmatmul.mubr.f32.gmra.mrb[0].mxu0 %v160
        %v1942 = vpop.f32.mrb[0].mxu0
        %v1943 = vadd.f32 0.0, %v1942
        %v1944 = vpop.f32.mrb[0].mxu0
        %1945 = vmatprep.mubr.f32.mxu0 0.0
        %1946 = vmatmul.mubr.f32.gmra.mrb[0].mxu0 %v236
        %v1947 = vpop.f32.mrb[0].mxu0
        %v1948 = vadd.f32 0.0, %v1947
        %v1949 = vpop.f32.mrb[0].mxu0
        %1950 = vmatprep.mubr.f32.mxu0 0.0
        %1951 = vmatmul.mubr.f32.gmra.mrb[0].mxu0 %v312
        %v1952 = vpop.f32.mrb[0].mxu0
        %v1953 = vadd.f32 0.0, %v1952
        %v1954 = vpop.f32.mrb[0].mxu0
        %1955 = vmatprep.mubr.f32.mxu0 0.0
        %1956 = vmatmul.mubr.f32.gmra.mrb[0].mxu0 %v388
        %v1957 = vpop.f32.mrb[0].mxu0
        %v1958 = vadd.f32 0.0, %v1957
        %v1959 = vpop.f32.mrb[0].mxu0
        %1960 = vmatprep.mubr.f32.mxu0 0.0
        %1961 = vmatmul.mubr.f32.gmra.mrb[0].mxu0 %v464
        %v1962 = vpop.f32.mrb[0].mxu0
        %v1963 = vadd.f32 0.0, %v1962
        %v1964 = vpop.f32.mrb[0].mxu0
        %1965 = vmatprep.mubr.f32.mxu0 0.0
        %1966 = vmatmul.mubr.f32.gmra.mrb[0].mxu0 %v540
        %v1967 = vpop.f32.mrb[0].mxu0
        %v1968 = vadd.f32 0.0, %v1967
        %v1969 = vpop.f32.mrb[0].mxu0
        %1970 = vdwg.mxu0
        %v1977 = vcombine.high %v1943, %v1943
        %v1979 = vunpack.c.l.s4 1966171168
        %v1980 = vunpack.c.0.s8 %v1979
        %v1981 = vlaneseq
        %v1982 = vshrl.u32 %v1981, 7
        %v1983 = vsub.s32 %v1980, %v1982
        %v1984 = vrot.slane %v1943, %v1983
        %v1986 = vunpack.c.l.s4 1966171168
        %v1987 = vunpack.c.0.s8 %v1986
        %v1988 = vlaneseq
        %v1989 = vshrl.u32 %v1988, 7
        %v1990 = vsub.s32 %v1987, %v1989
        %v1991 = vrot.slane %v1977, %v1990
        %v1992 = vcombine.high %v1984, %v1984
        %v1993 = vcombine.high %v1991, %v1991
        %v1995 = vunpack.c.l.s4 1966171168
        %v1996 = vunpack.c.0.s8 %v1995
        %v1997 = vlaneseq
        %v1998 = vshrl.u32 %v1997, 7
        %v1999 = vsub.s32 %v1996, %v1998
        %v2000 = vrot.slane %v1984, %v1999
        %v2002 = vunpack.c.l.s4 1966171168
        %v2003 = vunpack.c.0.s8 %v2002
        %v2004 = vlaneseq
        %v2005 = vshrl.u32 %v2004, 7
        %v2006 = vsub.s32 %v2003, %v2005
        %v2007 = vrot.slane %v1991, %v2006
        %v2009 = vunpack.c.l.s4 1966171168
        %v2010 = vunpack.c.0.s8 %v2009
        %v2011 = vlaneseq
        %v2012 = vshrl.u32 %v2011, 7
        %v2013 = vsub.s32 %v2010, %v2012
        %v2014 = vrot.slane %v1992, %v2013
        %v2016 = vunpack.c.l.s4 1966171168
        %v2017 = vunpack.c.0.s8 %v2016
        %v2018 = vlaneseq
        %v2019 = vshrl.u32 %v2018, 7
        %v2020 = vsub.s32 %v2017, %v2019
        %v2021 = vrot.slane %v1993, %v2020
        %v2022 = vcombine.high %v2000, %v2000
        %v2023 = vcombine.high %v2007, %v2007
        %v2024 = vcombine.high %v2014, %v2014
        %v2025 = vcombine.high %v2021, %v2021
        %v2026 = vcombine.high %v1948, %v1948
        %v2028 = vunpack.c.l.s4 1966171168
        %v2029 = vunpack.c.0.s8 %v2028
        %v2030 = vlaneseq
        %v2031 = vshrl.u32 %v2030, 7
        %v2032 = vsub.s32 %v2029, %v2031
        %v2033 = vrot.slane %v1948, %v2032
        %v2035 = vunpack.c.l.s4 1966171168
        %v2036 = vunpack.c.0.s8 %v2035
        %v2037 = vlaneseq
        %v2038 = vshrl.u32 %v2037, 7
        %v2039 = vsub.s32 %v2036, %v2038
        %v2040 = vrot.slane %v2026, %v2039
        %v2041 = vcombine.high %v2033, %v2033
        %v2042 = vcombine.high %v2040, %v2040
        %v2044 = vunpack.c.l.s4 1966171168
        %v2045 = vunpack.c.0.s8 %v2044
        %v2046 = vlaneseq
        %v2047 = vshrl.u32 %v2046, 7
        %v2048 = vsub.s32 %v2045, %v2047
        %v2049 = vrot.slane %v2033, %v2048
        %v2051 = vunpack.c.l.s4 1966171168
        %v2052 = vunpack.c.0.s8 %v2051
        %v2053 = vlaneseq
        %v2054 = vshrl.u32 %v2053, 7
        %v2055 = vsub.s32 %v2052, %v2054
        %v2056 = vrot.slane %v2040, %v2055
        %v2058 = vunpack.c.l.s4 1966171168
        %v2059 = vunpack.c.0.s8 %v2058
        %v2060 = vlaneseq
        %v2061 = vshrl.u32 %v2060, 7
        %v2062 = vsub.s32 %v2059, %v2061
        %v2063 = vrot.slane %v2041, %v2062
        %v2065 = vunpack.c.l.s4 1966171168
        %v2066 = vunpack.c.0.s8 %v2065
        %v2067 = vlaneseq
        %v2068 = vshrl.u32 %v2067, 7
        %v2069 = vsub.s32 %v2066, %v2068
        %v2070 = vrot.slane %v2042, %v2069
        %v2071 = vcombine.high %v2049, %v2049
        %v2072 = vcombine.high %v2056, %v2056
        %v2073 = vcombine.high %v2063, %v2063
        %v2074 = vcombine.high %v2070, %v2070
        %v2075 = vcombine.high %v1953, %v1953
        %v2077 = vunpack.c.l.s4 1966171168
        %v2078 = vunpack.c.0.s8 %v2077
        %v2079 = vlaneseq
        %v2080 = vshrl.u32 %v2079, 7
        %v2081 = vsub.s32 %v2078, %v2080
        %v2082 = vrot.slane %v1953, %v2081
        %v2084 = vunpack.c.l.s4 1966171168
        %v2085 = vunpack.c.0.s8 %v2084
        %v2086 = vlaneseq
        %v2087 = vshrl.u32 %v2086, 7
        %v2088 = vsub.s32 %v2085, %v2087
        %v2089 = vrot.slane %v2075, %v2088
        %v2090 = vcombine.high %v2082, %v2082
        %v2091 = vcombine.high %v2089, %v2089
        %v2093 = vunpack.c.l.s4 1966171168
        %v2094 = vunpack.c.0.s8 %v2093
        %v2095 = vlaneseq
        %v2096 = vshrl.u32 %v2095, 7
        %v2097 = vsub.s32 %v2094, %v2096
        %v2098 = vrot.slane %v2082, %v2097
        %v2100 = vunpack.c.l.s4 1966171168
        %v2101 = vunpack.c.0.s8 %v2100
        %v2102 = vlaneseq
        %v2103 = vshrl.u32 %v2102, 7
        %v2104 = vsub.s32 %v2101, %v2103
        %v2105 = vrot.slane %v2089, %v2104
        %v2107 = vunpack.c.l.s4 1966171168
        %v2108 = vunpack.c.0.s8 %v2107
        %v2109 = vlaneseq
        %v2110 = vshrl.u32 %v2109, 7
        %v2111 = vsub.s32 %v2108, %v2110
        %v2112 = vrot.slane %v2090, %v2111
        %v2114 = vunpack.c.l.s4 1966171168
        %v2115 = vunpack.c.0.s8 %v2114
        %v2116 = vlaneseq
        %v2117 = vshrl.u32 %v2116, 7
        %v2118 = vsub.s32 %v2115, %v2117
        %v2119 = vrot.slane %v2091, %v2118
        %v2120 = vcombine.high %v2098, %v2098
        %v2121 = vcombine.high %v2105, %v2105
        %v2122 = vcombine.high %v2112, %v2112
        %v2123 = vcombine.high %v2119, %v2119
        %v2124 = vcombine.high %v1958, %v1958
        %v2126 = vunpack.c.l.s4 1966171168
        %v2127 = vunpack.c.0.s8 %v2126
        %v2128 = vlaneseq
        %v2129 = vshrl.u32 %v2128, 7
        %v2130 = vsub.s32 %v2127, %v2129
        %v2131 = vrot.slane %v1958, %v2130
        %v2133 = vunpack.c.l.s4 1966171168
        %v2134 = vunpack.c.0.s8 %v2133
        %v2135 = vlaneseq
        %v2136 = vshrl.u32 %v2135, 7
        %v2137 = vsub.s32 %v2134, %v2136
        %v2138 = vrot.slane %v2124, %v2137
        %v2139 = vcombine.high %v2131, %v2131
        %v2140 = vcombine.high %v2138, %v2138
        %v2142 = vunpack.c.l.s4 1966171168
        %v2143 = vunpack.c.0.s8 %v2142
        %v2144 = vlaneseq
        %v2145 = vshrl.u32 %v2144, 7
        %v2146 = vsub.s32 %v2143, %v2145
        %v2147 = vrot.slane %v2131, %v2146
        %v2149 = vunpack.c.l.s4 1966171168
        %v2150 = vunpack.c.0.s8 %v2149
        %v2151 = vlaneseq
        %v2152 = vshrl.u32 %v2151, 7
        %v2153 = vsub.s32 %v2150, %v2152
        %v2154 = vrot.slane %v2138, %v2153
        %v2156 = vunpack.c.l.s4 1966171168
        %v2157 = vunpack.c.0.s8 %v2156
        %v2158 = vlaneseq
        %v2159 = vshrl.u32 %v2158, 7
        %v2160 = vsub.s32 %v2157, %v2159
        %v2161 = vrot.slane %v2139, %v2160
        %v2163 = vunpack.c.l.s4 1966171168
        %v2164 = vunpack.c.0.s8 %v2163
        %v2165 = vlaneseq
        %v2166 = vshrl.u32 %v2165, 7
        %v2167 = vsub.s32 %v2164, %v2166
        %v2168 = vrot.slane %v2140, %v2167
        %v2169 = vcombine.high %v2147, %v2147
        %v2170 = vcombine.high %v2154, %v2154
        %v2171 = vcombine.high %v2161, %v2161
        %v2172 = vcombine.high %v2168, %v2168
        %v2173 = vcombine.high %v1963, %v1963
        %v2175 = vunpack.c.l.s4 1966171168
        %v2176 = vunpack.c.0.s8 %v2175
        %v2177 = vlaneseq
        %v2178 = vshrl.u32 %v2177, 7
        %v2179 = vsub.s32 %v2176, %v2178
        %v2180 = vrot.slane %v1963, %v2179
        %v2182 = vunpack.c.l.s4 1966171168
        %v2183 = vunpack.c.0.s8 %v2182
        %v2184 = vlaneseq
        %v2185 = vshrl.u32 %v2184, 7
        %v2186 = vsub.s32 %v2183, %v2185
        %v2187 = vrot.slane %v2173, %v2186
        %v2188 = vcombine.high %v2180, %v2180
        %v2189 = vcombine.high %v2187, %v2187
        %v2191 = vunpack.c.l.s4 1966171168
        %v2192 = vunpack.c.0.s8 %v2191
        %v2193 = vlaneseq
        %v2194 = vshrl.u32 %v2193, 7
        %v2195 = vsub.s32 %v2192, %v2194
        %v2196 = vrot.slane %v2180, %v2195
        %v2198 = vunpack.c.l.s4 1966171168
        %v2199 = vunpack.c.0.s8 %v2198
        %v2200 = vlaneseq
        %v2201 = vshrl.u32 %v2200, 7
        %v2202 = vsub.s32 %v2199, %v2201
        %v2203 = vrot.slane %v2187, %v2202
        %v2205 = vunpack.c.l.s4 1966171168
        %v2206 = vunpack.c.0.s8 %v2205
        %v2207 = vlaneseq
        %v2208 = vshrl.u32 %v2207, 7
        %v2209 = vsub.s32 %v2206, %v2208
        %v2210 = vrot.slane %v2188, %v2209
        %v2212 = vunpack.c.l.s4 1966171168
        %v2213 = vunpack.c.0.s8 %v2212
        %v2214 = vlaneseq
        %v2215 = vshrl.u32 %v2214, 7
        %v2216 = vsub.s32 %v2213, %v2215
        %v2217 = vrot.slane %v2189, %v2216
        %v2218 = vcombine.high %v2196, %v2196
        %v2219 = vcombine.high %v2203, %v2203
        %v2220 = vcombine.high %v2210, %v2210
        %v2221 = vcombine.high %v2217, %v2217
        %v2222 = vcombine.high %v1968, %v1968
        %v2224 = vunpack.c.l.s4 1966171168
        %v2225 = vunpack.c.0.s8 %v2224
        %v2226 = vlaneseq
        %v2227 = vshrl.u32 %v2226, 7
        %v2228 = vsub.s32 %v2225, %v2227
        %v2229 = vrot.slane %v1968, %v2228
        %v2231 = vunpack.c.l.s4 1966171168
        %v2232 = vunpack.c.0.s8 %v2231
        %v2233 = vlaneseq
        %v2234 = vshrl.u32 %v2233, 7
        %v2235 = vsub.s32 %v2232, %v2234
        %v2236 = vrot.slane %v2222, %v2235
        %v2237 = vcombine.high %v2229, %v2229
        %v2238 = vcombine.high %v2236, %v2236
        %v2240 = vunpack.c.l.s4 1966171168
        %v2241 = vunpack.c.0.s8 %v2240
        %v2242 = vlaneseq
        %v2243 = vshrl.u32 %v2242, 7
        %v2244 = vsub.s32 %v2241, %v2243
        %v2245 = vrot.slane %v2229, %v2244
        %v2247 = vunpack.c.l.s4 1966171168
        %v2248 = vunpack.c.0.s8 %v2247
        %v2249 = vlaneseq
        %v2250 = vshrl.u32 %v2249, 7
        %v2251 = vsub.s32 %v2248, %v2250
        %v2252 = vrot.slane %v2236, %v2251
        %v2254 = vunpack.c.l.s4 1966171168
        %v2255 = vunpack.c.0.s8 %v2254
        %v2256 = vlaneseq
        %v2257 = vshrl.u32 %v2256, 7
        %v2258 = vsub.s32 %v2255, %v2257
        %v2259 = vrot.slane %v2237, %v2258
        %v2261 = vunpack.c.l.s4 1966171168
        %v2262 = vunpack.c.0.s8 %v2261
        %v2263 = vlaneseq
        %v2264 = vshrl.u32 %v2263, 7
        %v2265 = vsub.s32 %v2262, %v2264
        %v2266 = vrot.slane %v2238, %v2265
        %v2267 = vcombine.high %v2245, %v2245
        %v2268 = vcombine.high %v2252, %v2252
        %v2269 = vcombine.high %v2259, %v2259
        %v2270 = vcombine.high %v2266, %v2266
        %v2271 = vlaneseq
        %v2272 = vshrl.u32 %v2271, 7
        %v2273 = vsub.s32 0, %v2272
        %v2274 = vrot.slane %v2000, %v2273
        %v2275 = vlaneseq
        %v2276 = vshrl.u32 %v2275, 7
        %v2277 = vsub.s32 0, %v2276
        %v2278 = vrot.slane %v2014, %v2277
        %v2279 = vlaneseq
        %v2280 = vshrl.u32 %v2279, 7
        %v2281 = vsub.s32 0, %v2280
        %v2282 = vrot.slane %v2022, %v2281
        %v2283 = vlaneseq
        %v2284 = vshrl.u32 %v2283, 7
        %v2285 = vsub.s32 0, %v2284
        %v2286 = vrot.slane %v2024, %v2285
        %v2287 = vlaneseq
        %v2288 = vshrl.u32 %v2287, 7
        %v2289 = vsub.s32 0, %v2288
        %v2290 = vrot.slane %v2007, %v2289
        %v2291 = vlaneseq
        %v2292 = vshrl.u32 %v2291, 7
        %v2293 = vsub.s32 0, %v2292
        %v2294 = vrot.slane %v2021, %v2293
        %v2295 = vlaneseq
        %v2296 = vshrl.u32 %v2295, 7
        %v2297 = vsub.s32 0, %v2296
        %v2298 = vrot.slane %v2023, %v2297
        %v2299 = vlaneseq
        %v2300 = vshrl.u32 %v2299, 7
        %v2301 = vsub.s32 0, %v2300
        %v2302 = vrot.slane %v2025, %v2301
        %v2303 = vlaneseq
        %v2304 = vshrl.u32 %v2303, 7
        %v2305 = vsub.s32 0, %v2304
        %v2306 = vrot.slane %v2049, %v2305
        %v2307 = vlaneseq
        %v2308 = vshrl.u32 %v2307, 7
        %v2309 = vsub.s32 0, %v2308
        %v2310 = vrot.slane %v2063, %v2309
        %v2311 = vlaneseq
        %v2312 = vshrl.u32 %v2311, 7
        %v2313 = vsub.s32 0, %v2312
        %v2314 = vrot.slane %v2071, %v2313
        %v2315 = vlaneseq
        %v2316 = vshrl.u32 %v2315, 7
        %v2317 = vsub.s32 0, %v2316
        %v2318 = vrot.slane %v2073, %v2317
        %v2319 = vlaneseq
        %v2320 = vshrl.u32 %v2319, 7
        %v2321 = vsub.s32 0, %v2320
        %v2322 = vrot.slane %v2056, %v2321
        %v2323 = vlaneseq
        %v2324 = vshrl.u32 %v2323, 7
        %v2325 = vsub.s32 0, %v2324
        %v2326 = vrot.slane %v2070, %v2325
        %v2327 = vlaneseq
        %v2328 = vshrl.u32 %v2327, 7
        %v2329 = vsub.s32 0, %v2328
        %v2330 = vrot.slane %v2072, %v2329
        %v2331 = vlaneseq
        %v2332 = vshrl.u32 %v2331, 7
        %v2333 = vsub.s32 0, %v2332
        %v2334 = vrot.slane %v2074, %v2333
        %v2335 = vlaneseq
        %v2336 = vshrl.u32 %v2335, 7
        %v2337 = vsub.s32 0, %v2336
        %v2338 = vrot.slane %v2098, %v2337
        %v2339 = vlaneseq
        %v2340 = vshrl.u32 %v2339, 7
        %v2341 = vsub.s32 0, %v2340
        %v2342 = vrot.slane %v2112, %v2341
        %v2343 = vlaneseq
        %v2344 = vshrl.u32 %v2343, 7
        %v2345 = vsub.s32 0, %v2344
        %v2346 = vrot.slane %v2120, %v2345
        %v2347 = vlaneseq
        %v2348 = vshrl.u32 %v2347, 7
        %v2349 = vsub.s32 0, %v2348
        %v2350 = vrot.slane %v2122, %v2349
        %v2351 = vlaneseq
        %v2352 = vshrl.u32 %v2351, 7
        %v2353 = vsub.s32 0, %v2352
        %v2354 = vrot.slane %v2105, %v2353
        %v2355 = vlaneseq
        %v2356 = vshrl.u32 %v2355, 7
        %v2357 = vsub.s32 0, %v2356
        %v2358 = vrot.slane %v2119, %v2357
        %v2359 = vlaneseq
        %v2360 = vshrl.u32 %v2359, 7
        %v2361 = vsub.s32 0, %v2360
        %v2362 = vrot.slane %v2121, %v2361
        %v2363 = vlaneseq
        %v2364 = vshrl.u32 %v2363, 7
        %v2365 = vsub.s32 0, %v2364
        %v2366 = vrot.slane %v2123, %v2365
        %v2367 = vlaneseq
        %v2368 = vshrl.u32 %v2367, 7
        %v2369 = vsub.s32 0, %v2368
        %v2370 = vrot.slane %v2147, %v2369
        %v2371 = vlaneseq
        %v2372 = vshrl.u32 %v2371, 7
        %v2373 = vsub.s32 0, %v2372
        %v2374 = vrot.slane %v2161, %v2373
        %v2375 = vlaneseq
        %v2376 = vshrl.u32 %v2375, 7
        %v2377 = vsub.s32 0, %v2376
        %v2378 = vrot.slane %v2169, %v2377
        %v2379 = vlaneseq
        %v2380 = vshrl.u32 %v2379, 7
        %v2381 = vsub.s32 0, %v2380
        %v2382 = vrot.slane %v2171, %v2381
        %v2383 = vlaneseq
        %v2384 = vshrl.u32 %v2383, 7
        %v2385 = vsub.s32 0, %v2384
        %v2386 = vrot.slane %v2154, %v2385
        %v2387 = vlaneseq
        %v2388 = vshrl.u32 %v2387, 7
        %v2389 = vsub.s32 0, %v2388
        %v2390 = vrot.slane %v2168, %v2389
        %v2391 = vlaneseq
        %v2392 = vshrl.u32 %v2391, 7
        %v2393 = vsub.s32 0, %v2392
        %v2394 = vrot.slane %v2170, %v2393
        %v2395 = vlaneseq
        %v2396 = vshrl.u32 %v2395, 7
        %v2397 = vsub.s32 0, %v2396
        %v2398 = vrot.slane %v2172, %v2397
        %v2399 = vlaneseq
        %v2400 = vshrl.u32 %v2399, 7
        %v2401 = vsub.s32 0, %v2400
        %v2402 = vrot.slane %v2196, %v2401
        %v2403 = vlaneseq
        %v2404 = vshrl.u32 %v2403, 7
        %v2405 = vsub.s32 0, %v2404
        %v2406 = vrot.slane %v2210, %v2405
        %v2407 = vlaneseq
        %v2408 = vshrl.u32 %v2407, 7
        %v2409 = vsub.s32 0, %v2408
        %v2410 = vrot.slane %v2218, %v2409
        %v2411 = vlaneseq
        %v2412 = vshrl.u32 %v2411, 7
        %v2413 = vsub.s32 0, %v2412
        %v2414 = vrot.slane %v2220, %v2413
        %v2415 = vlaneseq
        %v2416 = vshrl.u32 %v2415, 7
        %v2417 = vsub.s32 0, %v2416
        %v2418 = vrot.slane %v2203, %v2417
        %v2419 = vlaneseq
        %v2420 = vshrl.u32 %v2419, 7
        %v2421 = vsub.s32 0, %v2420
        %v2422 = vrot.slane %v2217, %v2421
        %v2423 = vlaneseq
        %v2424 = vshrl.u32 %v2423, 7
        %v2425 = vsub.s32 0, %v2424
        %v2426 = vrot.slane %v2219, %v2425
        %v2427 = vlaneseq
        %v2428 = vshrl.u32 %v2427, 7
        %v2429 = vsub.s32 0, %v2428
        %v2430 = vrot.slane %v2221, %v2429
        %v2431 = vlaneseq
        %v2432 = vshrl.u32 %v2431, 7
        %v2433 = vsub.s32 0, %v2432
        %v2434 = vrot.slane %v2245, %v2433
        %v2435 = vlaneseq
        %v2436 = vshrl.u32 %v2435, 7
        %v2437 = vsub.s32 0, %v2436
        %v2438 = vrot.slane %v2259, %v2437
        %v2439 = vlaneseq
        %v2440 = vshrl.u32 %v2439, 7
        %v2441 = vsub.s32 0, %v2440
        %v2442 = vrot.slane %v2267, %v2441
        %v2443 = vlaneseq
        %v2444 = vshrl.u32 %v2443, 7
        %v2445 = vsub.s32 0, %v2444
        %v2446 = vrot.slane %v2269, %v2445
        %v2447 = vlaneseq
        %v2448 = vshrl.u32 %v2447, 7
        %v2449 = vsub.s32 0, %v2448
        %v2450 = vrot.slane %v2252, %v2449
        %v2451 = vlaneseq
        %v2452 = vshrl.u32 %v2451, 7
        %v2453 = vsub.s32 0, %v2452
        %v2454 = vrot.slane %v2266, %v2453
        %v2455 = vlaneseq
        %v2456 = vshrl.u32 %v2455, 7
        %v2457 = vsub.s32 0, %v2456
        %v2458 = vrot.slane %v2268, %v2457
        %v2459 = vlaneseq
        %v2460 = vshrl.u32 %v2459, 7
        %v2461 = vsub.s32 0, %v2460
        %v2462 = vrot.slane %v2270, %v2461
        %v2511 = vsub.f32 %v2274, %v921
        %v2512 = vsub.f32 %v2278, %v928
        %v2513 = vsub.f32 %v2282, %v935
        %v2514 = vsub.f32 %v2286, %v942
        %v2515 = vsub.f32 %v2290, %v949
        %v2516 = vsub.f32 %v2294, %v956
        %v2517 = vsub.f32 %v2298, %v963
        %v2518 = vsub.f32 %v2302, %v970
        %v2519 = vsub.f32 %v2306, %v977
        %v2520 = vsub.f32 %v2310, %v984
        %v2521 = vsub.f32 %v2314, %v991
        %v2522 = vsub.f32 %v2318, %v998
        %v2523 = vsub.f32 %v2322, %v1005
        %v2524 = vsub.f32 %v2326, %v1012
        %v2525 = vsub.f32 %v2330, %v1019
        %v2526 = vsub.f32 %v2334, %v1026
        %v2527 = vsub.f32 %v2338, %v1033
        %v2528 = vsub.f32 %v2342, %v1040
        %v2529 = vsub.f32 %v2346, %v1047
        %v2530 = vsub.f32 %v2350, %v1054
        %v2531 = vsub.f32 %v2354, %v1061
        %v2532 = vsub.f32 %v2358, %v1068
        %v2533 = vsub.f32 %v2362, %v1075
        %v2534 = vsub.f32 %v2366, %v1082
        %v2535 = vsub.f32 %v2370, %v1089
        %v2536 = vsub.f32 %v2374, %v1096
        %v2537 = vsub.f32 %v2378, %v1103
        %v2538 = vsub.f32 %v2382, %v1110
        %v2539 = vsub.f32 %v2386, %v1117
        %v2540 = vsub.f32 %v2390, %v1124
        %v2541 = vsub.f32 %v2394, %v1131
        %v2542 = vsub.f32 %v2398, %v1138
        %v2543 = vsub.f32 %v2402, %v1145
        %v2544 = vsub.f32 %v2406, %v1152
        %v2545 = vsub.f32 %v2410, %v1159
        %v2546 = vsub.f32 %v2414, %v1166
        %v2547 = vsub.f32 %v2418, %v1173
        %v2548 = vsub.f32 %v2422, %v1180
        %v2549 = vsub.f32 %v2426, %v1187
        %v2550 = vsub.f32 %v2430, %v1194
        %v2551 = vsub.f32 %v2434, %v1201
        %v2552 = vsub.f32 %v2438, %v1208
        %v2553 = vsub.f32 %v2442, %v1215
        %v2554 = vsub.f32 %v2446, %v1222
        %v2555 = vsub.f32 %v2450, %v1229
        %v2556 = vsub.f32 %v2454, %v1236
        %v2557 = vsub.f32 %v2458, %v1243
        %v2558 = vsub.f32 %v2462, %v1250
        %v2559 = vtanh.pop %v2511
        %v2560 = vtanh.pop %v2512
        %v2561 = vtanh.pop %v2513
        %v2562 = vtanh.pop %v2514
        %v2563 = vtanh.pop %v2515
        %v2564 = vtanh.pop %v2516
        %v2565 = vtanh.pop %v2517
        %v2566 = vtanh.pop %v2518
        %v2567 = vtanh.pop %v2519
        %v2568 = vtanh.pop %v2520
        %v2569 = vtanh.pop %v2521
        %v2570 = vtanh.pop %v2522
        %v2571 = vtanh.pop %v2523
        %v2572 = vtanh.pop %v2524
        %v2573 = vtanh.pop %v2525
        %v2574 = vtanh.pop %v2526
        %v2575 = vtanh.pop %v2527
        %v2576 = vtanh.pop %v2528
        %v2577 = vtanh.pop %v2529
        %v2578 = vtanh.pop %v2530
        %v2579 = vtanh.pop %v2531
        %v2580 = vtanh.pop %v2532
        %v2581 = vtanh.pop %v2533
        %v2582 = vtanh.pop %v2534
        %v2583 = vtanh.pop %v2535
        %v2584 = vtanh.pop %v2536
        %v2585 = vtanh.pop %v2537
        %v2586 = vtanh.pop %v2538
        %v2587 = vtanh.pop %v2539
        %v2588 = vtanh.pop %v2540
        %v2589 = vtanh.pop %v2541
        %v2590 = vtanh.pop %v2542
        %v2591 = vtanh.pop %v2543
        %v2592 = vtanh.pop %v2544
        %v2593 = vtanh.pop %v2545
        %v2594 = vtanh.pop %v2546
        %v2595 = vtanh.pop %v2547
        %v2596 = vtanh.pop %v2548
        %v2597 = vtanh.pop %v2549
        %v2598 = vtanh.pop %v2550
        %v2599 = vtanh.pop %v2551
        %v2600 = vtanh.pop %v2552
        %v2601 = vtanh.pop %v2553
        %v2602 = vtanh.pop %v2554
        %v2603 = vtanh.pop %v2555
        %v2604 = vtanh.pop %v2556
        %v2605 = vtanh.pop %v2557
        %v2606 = vtanh.pop %v2558
        %vm2607 = vcmask 785408
        %v2608 = vsel %vm2607, %v2559, 0.0
        %2609 = vadd.xlane.f32.xlu0 %v2608
        %v2610 = vpop.xlane.xlu0 %2609
        %v2611 = vsel %vm2607, %v2560, 0.0
        %2612 = vadd.xlane.f32.xlu0 %v2611
        %v2613 = vpop.xlane.xlu0 %2612
        %v2614 = vsel %vm2607, %v2561, 0.0
        %2615 = vadd.xlane.f32.xlu0 %v2614
        %v2616 = vpop.xlane.xlu0 %2615
        %v2617 = vsel %vm2607, %v2562, 0.0
        %2618 = vadd.xlane.f32.xlu0 %v2617
        %v2619 = vpop.xlane.xlu0 %2618
        %v2620 = vsel %vm2607, %v2563, 0.0
        %2621 = vadd.xlane.f32.xlu0 %v2620
        %v2622 = vpop.xlane.xlu0 %2621
        %v2623 = vsel %vm2607, %v2564, 0.0
        %2624 = vadd.xlane.f32.xlu0 %v2623
        %v2625 = vpop.xlane.xlu0 %2624
        %v2626 = vsel %vm2607, %v2565, 0.0
        %2627 = vadd.xlane.f32.xlu0 %v2626
        %v2628 = vpop.xlane.xlu0 %2627
        %v2629 = vsel %vm2607, %v2566, 0.0
        %2630 = vadd.xlane.f32.xlu0 %v2629
        %v2631 = vpop.xlane.xlu0 %2630
        %v2632 = vsel %vm2607, %v2567, 0.0
        %2633 = vadd.xlane.f32.xlu0 %v2632
        %v2634 = vpop.xlane.xlu0 %2633
        %v2635 = vsel %vm2607, %v2568, 0.0
        %2636 = vadd.xlane.f32.xlu0 %v2635
        %v2637 = vpop.xlane.xlu0 %2636
        %v2638 = vsel %vm2607, %v2569, 0.0
        %2639 = vadd.xlane.f32.xlu0 %v2638
        %v2640 = vpop.xlane.xlu0 %2639
        %v2641 = vsel %vm2607, %v2570, 0.0
        %2642 = vadd.xlane.f32.xlu0 %v2641
        %v2643 = vpop.xlane.xlu0 %2642
        %v2644 = vsel %vm2607, %v2571, 0.0
        %2645 = vadd.xlane.f32.xlu0 %v2644
        %v2646 = vpop.xlane.xlu0 %2645
        %v2647 = vsel %vm2607, %v2572, 0.0
        %2648 = vadd.xlane.f32.xlu0 %v2647
        %v2649 = vpop.xlane.xlu0 %2648
        %v2650 = vsel %vm2607, %v2573, 0.0
        %2651 = vadd.xlane.f32.xlu0 %v2650
        %v2652 = vpop.xlane.xlu0 %2651
        %v2653 = vsel %vm2607, %v2574, 0.0
        %2654 = vadd.xlane.f32.xlu0 %v2653
        %v2655 = vpop.xlane.xlu0 %2654
        %v2656 = vsel %vm2607, %v2575, 0.0
        %2657 = vadd.xlane.f32.xlu0 %v2656
        %v2658 = vpop.xlane.xlu0 %2657
        %v2659 = vsel %vm2607, %v2576, 0.0
        %2660 = vadd.xlane.f32.xlu0 %v2659
        %v2661 = vpop.xlane.xlu0 %2660
        %v2662 = vsel %vm2607, %v2577, 0.0
        %2663 = vadd.xlane.f32.xlu0 %v2662
        %v2664 = vpop.xlane.xlu0 %2663
        %v2665 = vsel %vm2607, %v2578, 0.0
        %2666 = vadd.xlane.f32.xlu0 %v2665
        %v2667 = vpop.xlane.xlu0 %2666
        %v2668 = vsel %vm2607, %v2579, 0.0
        %2669 = vadd.xlane.f32.xlu0 %v2668
        %v2670 = vpop.xlane.xlu0 %2669
        %v2671 = vsel %vm2607, %v2580, 0.0
        %2672 = vadd.xlane.f32.xlu0 %v2671
        %v2673 = vpop.xlane.xlu0 %2672
        %v2674 = vsel %vm2607, %v2581, 0.0
        %2675 = vadd.xlane.f32.xlu0 %v2674
        %v2676 = vpop.xlane.xlu0 %2675
        %v2677 = vsel %vm2607, %v2582, 0.0
        %2678 = vadd.xlane.f32.xlu0 %v2677
        %v2679 = vpop.xlane.xlu0 %2678
        %v2680 = vsel %vm2607, %v2583, 0.0
        %2681 = vadd.xlane.f32.xlu0 %v2680
        %v2682 = vpop.xlane.xlu0 %2681
        %v2683 = vsel %vm2607, %v2584, 0.0
        %2684 = vadd.xlane.f32.xlu0 %v2683
        %v2685 = vpop.xlane.xlu0 %2684
        %v2686 = vsel %vm2607, %v2585, 0.0
        %2687 = vadd.xlane.f32.xlu0 %v2686
        %v2688 = vpop.xlane.xlu0 %2687
        %v2689 = vsel %vm2607, %v2586, 0.0
        %2690 = vadd.xlane.f32.xlu0 %v2689
        %v2691 = vpop.xlane.xlu0 %2690
        %v2692 = vsel %vm2607, %v2587, 0.0
        %2693 = vadd.xlane.f32.xlu0 %v2692
        %v2694 = vpop.xlane.xlu0 %2693
        %v2695 = vsel %vm2607, %v2588, 0.0
        %2696 = vadd.xlane.f32.xlu0 %v2695
        %v2697 = vpop.xlane.xlu0 %2696
        %v2698 = vsel %vm2607, %v2589, 0.0
        %2699 = vadd.xlane.f32.xlu0 %v2698
        %v2700 = vpop.xlane.xlu0 %2699
        %v2701 = vsel %vm2607, %v2590, 0.0
        %2702 = vadd.xlane.f32.xlu0 %v2701
        %v2703 = vpop.xlane.xlu0 %2702
        %v2704 = vsel %vm2607, %v2591, 0.0
        %2705 = vadd.xlane.f32.xlu0 %v2704
        %v2706 = vpop.xlane.xlu0 %2705
        %v2707 = vsel %vm2607, %v2592, 0.0
        %2708 = vadd.xlane.f32.xlu0 %v2707
        %v2709 = vpop.xlane.xlu0 %2708
        %v2710 = vsel %vm2607, %v2593, 0.0
        %2711 = vadd.xlane.f32.xlu0 %v2710
        %v2712 = vpop.xlane.xlu0 %2711
        %v2713 = vsel %vm2607, %v2594, 0.0
        %2714 = vadd.xlane.f32.xlu0 %v2713
        %v2715 = vpop.xlane.xlu0 %2714
        %v2716 = vsel %vm2607, %v2595, 0.0
        %2717 = vadd.xlane.f32.xlu0 %v2716
        %v2718 = vpop.xlane.xlu0 %2717
        %v2719 = vsel %vm2607, %v2596, 0.0
        %2720 = vadd.xlane.f32.xlu0 %v2719
        %v2721 = vpop.xlane.xlu0 %2720
        %v2722 = vsel %vm2607, %v2597, 0.0
        %2723 = vadd.xlane.f32.xlu0 %v2722
        %v2724 = vpop.xlane.xlu0 %2723
        %v2725 = vsel %vm2607, %v2598, 0.0
        %2726 = vadd.xlane.f32.xlu0 %v2725
        %v2727 = vpop.xlane.xlu0 %2726
        %v2728 = vsel %vm2607, %v2599, 0.0
        %2729 = vadd.xlane.f32.xlu0 %v2728
        %v2730 = vpop.xlane.xlu0 %2729
        %v2731 = vsel %vm2607, %v2600, 0.0
        %2732 = vadd.xlane.f32.xlu0 %v2731
        %v2733 = vpop.xlane.xlu0 %2732
        %v2734 = vsel %vm2607, %v2601, 0.0
        %2735 = vadd.xlane.f32.xlu0 %v2734
        %v2736 = vpop.xlane.xlu0 %2735
        %v2737 = vsel %vm2607, %v2602, 0.0
        %2738 = vadd.xlane.f32.xlu0 %v2737
        %v2739 = vpop.xlane.xlu0 %2738
        %v2740 = vsel %vm2607, %v2603, 0.0
        %2741 = vadd.xlane.f32.xlu0 %v2740
        %v2742 = vpop.xlane.xlu0 %2741
        %v2743 = vsel %vm2607, %v2604, 0.0
        %2744 = vadd.xlane.f32.xlu0 %v2743
        %v2745 = vpop.xlane.xlu0 %2744
        %v2746 = vsel %vm2607, %v2605, 0.0
        %2747 = vadd.xlane.f32.xlu0 %v2746
        %v2748 = vpop.xlane.xlu0 %2747
        %v2749 = vsel %vm2607, %v2606, 0.0
        %2750 = vadd.xlane.f32.xlu0 %v2749
        %v2751 = vpop.xlane.xlu0 %2750
        %v2752 = vadd.f32 %v2610, 96.0
        %v2753 = vadd.f32 %v2613, 96.0
        %v2754 = vadd.f32 %v2616, 96.0
        %v2755 = vadd.f32 %v2619, 96.0
        %v2756 = vadd.f32 %v2622, 96.0
        %v2757 = vadd.f32 %v2625, 96.0
        %v2758 = vadd.f32 %v2628, 96.0
        %v2759 = vadd.f32 %v2631, 96.0
        %v2760 = vadd.f32 %v2634, 96.0
        %v2761 = vadd.f32 %v2637, 96.0
        %v2762 = vadd.f32 %v2640, 96.0
        %v2763 = vadd.f32 %v2643, 96.0
        %v2764 = vadd.f32 %v2646, 96.0
        %v2765 = vadd.f32 %v2649, 96.0
        %v2766 = vadd.f32 %v2652, 96.0
        %v2767 = vadd.f32 %v2655, 96.0
        %v2768 = vadd.f32 %v2658, 96.0
        %v2769 = vadd.f32 %v2661, 96.0
        %v2770 = vadd.f32 %v2664, 96.0
        %v2771 = vadd.f32 %v2667, 96.0
        %v2772 = vadd.f32 %v2670, 96.0
        %v2773 = vadd.f32 %v2673, 96.0
        %v2774 = vadd.f32 %v2676, 96.0
        %v2775 = vadd.f32 %v2679, 96.0
        %v2776 = vadd.f32 %v2682, 96.0
        %v2777 = vadd.f32 %v2685, 96.0
        %v2778 = vadd.f32 %v2688, 96.0
        %v2779 = vadd.f32 %v2691, 96.0
        %v2780 = vadd.f32 %v2694, 96.0
        %v2781 = vadd.f32 %v2697, 96.0
        %v2782 = vadd.f32 %v2700, 96.0
        %v2783 = vadd.f32 %v2703, 96.0
        %v2784 = vadd.f32 %v2706, 96.0
        %v2785 = vadd.f32 %v2709, 96.0
        %v2786 = vadd.f32 %v2712, 96.0
        %v2787 = vadd.f32 %v2715, 96.0
        %v2788 = vadd.f32 %v2718, 96.0
        %v2789 = vadd.f32 %v2721, 96.0
        %v2790 = vadd.f32 %v2724, 96.0
        %v2791 = vadd.f32 %v2727, 96.0
        %v2792 = vadd.f32 %v2730, 96.0
        %v2793 = vadd.f32 %v2733, 96.0
        %v2794 = vadd.f32 %v2736, 96.0
        %v2795 = vadd.f32 %v2739, 96.0
        %v2796 = vadd.f32 %v2742, 96.0
        %v2797 = vadd.f32 %v2745, 96.0
        %v2798 = vadd.f32 %v2748, 96.0
        %v2799 = vadd.f32 %v2751, 96.0
        %v2800 = vmul.f32 %v2752, 0.5
        %v2801 = vmul.f32 %v2753, 0.5
        %v2802 = vmul.f32 %v2754, 0.5
        %v2803 = vmul.f32 %v2755, 0.5
        %v2804 = vmul.f32 %v2756, 0.5
        %v2805 = vmul.f32 %v2757, 0.5
        %v2806 = vmul.f32 %v2758, 0.5
        %v2807 = vmul.f32 %v2759, 0.5
        %v2808 = vmul.f32 %v2760, 0.5
        %v2809 = vmul.f32 %v2761, 0.5
        %v2810 = vmul.f32 %v2762, 0.5
        %v2811 = vmul.f32 %v2763, 0.5
        %v2812 = vmul.f32 %v2764, 0.5
        %v2813 = vmul.f32 %v2765, 0.5
        %v2814 = vmul.f32 %v2766, 0.5
        %v2815 = vmul.f32 %v2767, 0.5
        %v2816 = vmul.f32 %v2768, 0.5
        %v2817 = vmul.f32 %v2769, 0.5
        %v2818 = vmul.f32 %v2770, 0.5
        %v2819 = vmul.f32 %v2771, 0.5
        %v2820 = vmul.f32 %v2772, 0.5
        %v2821 = vmul.f32 %v2773, 0.5
        %v2822 = vmul.f32 %v2774, 0.5
        %v2823 = vmul.f32 %v2775, 0.5
        %v2824 = vmul.f32 %v2776, 0.5
        %v2825 = vmul.f32 %v2777, 0.5
        %v2826 = vmul.f32 %v2778, 0.5
        %v2827 = vmul.f32 %v2779, 0.5
        %v2828 = vmul.f32 %v2780, 0.5
        %v2829 = vmul.f32 %v2781, 0.5
        %v2830 = vmul.f32 %v2782, 0.5
        %v2831 = vmul.f32 %v2783, 0.5
        %v2832 = vmul.f32 %v2784, 0.5
        %v2833 = vmul.f32 %v2785, 0.5
        %v2834 = vmul.f32 %v2786, 0.5
        %v2835 = vmul.f32 %v2787, 0.5
        %v2836 = vmul.f32 %v2788, 0.5
        %v2837 = vmul.f32 %v2789, 0.5
        %v2838 = vmul.f32 %v2790, 0.5
        %v2839 = vmul.f32 %v2791, 0.5
        %v2840 = vmul.f32 %v2792, 0.5
        %v2841 = vmul.f32 %v2793, 0.5
        %v2842 = vmul.f32 %v2794, 0.5
        %v2843 = vmul.f32 %v2795, 0.5
        %v2844 = vmul.f32 %v2796, 0.5
        %v2845 = vmul.f32 %v2797, 0.5
        %v2846 = vmul.f32 %v2798, 0.5
        %v2847 = vmul.f32 %v2799, 0.5
        %v2848 = vrcp.pop %v2800
        %v2849 = vrcp.pop %v2801
        %v2850 = vrcp.pop %v2802
        %v2851 = vrcp.pop %v2803
        %v2852 = vrcp.pop %v2804
        %v2853 = vrcp.pop %v2805
        %v2854 = vrcp.pop %v2806
        %v2855 = vrcp.pop %v2807
        %v2856 = vrcp.pop %v2808
        %v2857 = vrcp.pop %v2809
        %v2858 = vrcp.pop %v2810
        %v2859 = vrcp.pop %v2811
        %v2860 = vrcp.pop %v2812
        %v2861 = vrcp.pop %v2813
        %v2862 = vrcp.pop %v2814
        %v2863 = vrcp.pop %v2815
        %v2864 = vrcp.pop %v2816
        %v2865 = vrcp.pop %v2817
        %v2866 = vrcp.pop %v2818
        %v2867 = vrcp.pop %v2819
        %v2868 = vrcp.pop %v2820
        %v2869 = vrcp.pop %v2821
        %v2870 = vrcp.pop %v2822
        %v2871 = vrcp.pop %v2823
        %v2872 = vrcp.pop %v2824
        %v2873 = vrcp.pop %v2825
        %v2874 = vrcp.pop %v2826
        %v2875 = vrcp.pop %v2827
        %v2876 = vrcp.pop %v2828
        %v2877 = vrcp.pop %v2829
        %v2878 = vrcp.pop %v2830
        %v2879 = vrcp.pop %v2831
        %v2880 = vrcp.pop %v2832
        %v2881 = vrcp.pop %v2833
        %v2882 = vrcp.pop %v2834
        %v2883 = vrcp.pop %v2835
        %v2884 = vrcp.pop %v2836
        %v2885 = vrcp.pop %v2837
        %v2886 = vrcp.pop %v2838
        %v2887 = vrcp.pop %v2839
        %v2888 = vrcp.pop %v2840
        %v2889 = vrcp.pop %v2841
        %v2890 = vrcp.pop %v2842
        %v2891 = vrcp.pop %v2843
        %v2892 = vrcp.pop %v2844
        %v2893 = vrcp.pop %v2845
        %v2894 = vrcp.pop %v2846
        %v2895 = vrcp.pop %v2847
        %v2896 = vmul.f32 %v1780, %v2848
        %v2897 = vmul.f32 %v1781, %v2849
        %v2898 = vmul.f32 %v1782, %v2850
        %v2899 = vmul.f32 %v1783, %v2851
        %v2900 = vmul.f32 %v1784, %v2852
        %v2901 = vmul.f32 %v1785, %v2853
        %v2902 = vmul.f32 %v1786, %v2854
        %v2903 = vmul.f32 %v1787, %v2855
        %v2904 = vmul.f32 %v1788, %v2856
        %v2905 = vmul.f32 %v1789, %v2857
        %v2906 = vmul.f32 %v1790, %v2858
        %v2907 = vmul.f32 %v1791, %v2859
        %v2908 = vmul.f32 %v1792, %v2860
        %v2909 = vmul.f32 %v1793, %v2861
        %v2910 = vmul.f32 %v1794, %v2862
        %v2911 = vmul.f32 %v1795, %v2863
        %v2912 = vmul.f32 %v1796, %v2864
        %v2913 = vmul.f32 %v1797, %v2865
        %v2914 = vmul.f32 %v1798, %v2866
        %v2915 = vmul.f32 %v1799, %v2867
        %v2916 = vmul.f32 %v1800, %v2868
        %v2917 = vmul.f32 %v1801, %v2869
        %v2918 = vmul.f32 %v1802, %v2870
        %v2919 = vmul.f32 %v1803, %v2871
        %v2920 = vmul.f32 %v1804, %v2872
        %v2921 = vmul.f32 %v1805, %v2873
        %v2922 = vmul.f32 %v1806, %v2874
        %v2923 = vmul.f32 %v1807, %v2875
        %v2924 = vmul.f32 %v1808, %v2876
        %v2925 = vmul.f32 %v1809, %v2877
        %v2926 = vmul.f32 %v1810, %v2878
        %v2927 = vmul.f32 %v1811, %v2879
        %v2928 = vmul.f32 %v1812, %v2880
        %v2929 = vmul.f32 %v1813, %v2881
        %v2930 = vmul.f32 %v1814, %v2882
        %v2931 = vmul.f32 %v1815, %v2883
        %v2932 = vmul.f32 %v1816, %v2884
        %v2933 = vmul.f32 %v1817, %v2885
        %v2934 = vmul.f32 %v1818, %v2886
        %v2935 = vmul.f32 %v1819, %v2887
        %v2936 = vmul.f32 %v1820, %v2888
        %v2937 = vmul.f32 %v1821, %v2889
        %v2938 = vmul.f32 %v1822, %v2890
        %v2939 = vmul.f32 %v1823, %v2891
        %v2940 = vmul.f32 %v1824, %v2892
        %v2941 = vmul.f32 %v1825, %v2893
        %v2942 = vmul.f32 %v1826, %v2894
        %v2943 = vmul.f32 %v1827, %v2895
        %v2992 = vlaneseq
        %v2993 = vand.u32 %v2992, 127
        %v2994 = vlaneseq
        %v2995 = vshrl.u32 %v2994, 7
        %v2996 = vsub.s32 %v2993, %v2995
        %v2997 = vrot.slane %v2896, %v2996
        %v2998 = vlaneseq
        %v2999 = vshrl.u32 %v2998, 7
        %v3000 = vsub.s32 %v2993, %v2999
        %v3001 = vrot.slane %v2897, %v3000
        %v3002 = vlaneseq
        %v3003 = vshrl.u32 %v3002, 7
        %v3004 = vsub.s32 %v2993, %v3003
        %v3005 = vrot.slane %v2898, %v3004
        %v3006 = vlaneseq
        %v3007 = vshrl.u32 %v3006, 7
        %v3008 = vsub.s32 %v2993, %v3007
        %v3009 = vrot.slane %v2899, %v3008
        %v3010 = vlaneseq
        %v3011 = vshrl.u32 %v3010, 7
        %v3012 = vsub.s32 %v2993, %v3011
        %v3013 = vrot.slane %v2900, %v3012
        %v3014 = vlaneseq
        %v3015 = vshrl.u32 %v3014, 7
        %v3016 = vsub.s32 %v2993, %v3015
        %v3017 = vrot.slane %v2901, %v3016
        %v3018 = vlaneseq
        %v3019 = vshrl.u32 %v3018, 7
        %v3020 = vsub.s32 %v2993, %v3019
        %v3021 = vrot.slane %v2902, %v3020
        %v3022 = vlaneseq
        %v3023 = vshrl.u32 %v3022, 7
        %v3024 = vsub.s32 %v2993, %v3023
        %v3025 = vrot.slane %v2903, %v3024
        %v3026 = vlaneseq
        %v3027 = vshrl.u32 %v3026, 7
        %v3028 = vsub.s32 %v2993, %v3027
        %v3029 = vrot.slane %v2904, %v3028
        %v3030 = vlaneseq
        %v3031 = vshrl.u32 %v3030, 7
        %v3032 = vsub.s32 %v2993, %v3031
        %v3033 = vrot.slane %v2905, %v3032
        %v3034 = vlaneseq
        %v3035 = vshrl.u32 %v3034, 7
        %v3036 = vsub.s32 %v2993, %v3035
        %v3037 = vrot.slane %v2906, %v3036
        %v3038 = vlaneseq
        %v3039 = vshrl.u32 %v3038, 7
        %v3040 = vsub.s32 %v2993, %v3039
        %v3041 = vrot.slane %v2907, %v3040
        %v3042 = vlaneseq
        %v3043 = vshrl.u32 %v3042, 7
        %v3044 = vsub.s32 %v2993, %v3043
        %v3045 = vrot.slane %v2908, %v3044
        %v3046 = vlaneseq
        %v3047 = vshrl.u32 %v3046, 7
        %v3048 = vsub.s32 %v2993, %v3047
        %v3049 = vrot.slane %v2909, %v3048
        %v3050 = vlaneseq
        %v3051 = vshrl.u32 %v3050, 7
        %v3052 = vsub.s32 %v2993, %v3051
        %v3053 = vrot.slane %v2910, %v3052
        %v3054 = vlaneseq
        %v3055 = vshrl.u32 %v3054, 7
        %v3056 = vsub.s32 %v2993, %v3055
        %v3057 = vrot.slane %v2911, %v3056
        %v3058 = vlaneseq
        %v3059 = vshrl.u32 %v3058, 7
        %v3060 = vsub.s32 %v2993, %v3059
        %v3061 = vrot.slane %v2912, %v3060
        %v3062 = vlaneseq
        %v3063 = vshrl.u32 %v3062, 7
        %v3064 = vsub.s32 %v2993, %v3063
        %v3065 = vrot.slane %v2913, %v3064
        %v3066 = vlaneseq
        %v3067 = vshrl.u32 %v3066, 7
        %v3068 = vsub.s32 %v2993, %v3067
        %v3069 = vrot.slane %v2914, %v3068
        %v3070 = vlaneseq
        %v3071 = vshrl.u32 %v3070, 7
        %v3072 = vsub.s32 %v2993, %v3071
        %v3073 = vrot.slane %v2915, %v3072
        %v3074 = vlaneseq
        %v3075 = vshrl.u32 %v3074, 7
        %v3076 = vsub.s32 %v2993, %v3075
        %v3077 = vrot.slane %v2916, %v3076
        %v3078 = vlaneseq
        %v3079 = vshrl.u32 %v3078, 7
        %v3080 = vsub.s32 %v2993, %v3079
        %v3081 = vrot.slane %v2917, %v3080
        %v3082 = vlaneseq
        %v3083 = vshrl.u32 %v3082, 7
        %v3084 = vsub.s32 %v2993, %v3083
        %v3085 = vrot.slane %v2918, %v3084
        %v3086 = vlaneseq
        %v3087 = vshrl.u32 %v3086, 7
        %v3088 = vsub.s32 %v2993, %v3087
        %v3089 = vrot.slane %v2919, %v3088
        %v3090 = vlaneseq
        %v3091 = vshrl.u32 %v3090, 7
        %v3092 = vsub.s32 %v2993, %v3091
        %v3093 = vrot.slane %v2920, %v3092
        %v3094 = vlaneseq
        %v3095 = vshrl.u32 %v3094, 7
        %v3096 = vsub.s32 %v2993, %v3095
        %v3097 = vrot.slane %v2921, %v3096
        %v3098 = vlaneseq
        %v3099 = vshrl.u32 %v3098, 7
        %v3100 = vsub.s32 %v2993, %v3099
        %v3101 = vrot.slane %v2922, %v3100
        %v3102 = vlaneseq
        %v3103 = vshrl.u32 %v3102, 7
        %v3104 = vsub.s32 %v2993, %v3103
        %v3105 = vrot.slane %v2923, %v3104
        %v3106 = vlaneseq
        %v3107 = vshrl.u32 %v3106, 7
        %v3108 = vsub.s32 %v2993, %v3107
        %v3109 = vrot.slane %v2924, %v3108
        %v3110 = vlaneseq
        %v3111 = vshrl.u32 %v3110, 7
        %v3112 = vsub.s32 %v2993, %v3111
        %v3113 = vrot.slane %v2925, %v3112
        %v3114 = vlaneseq
        %v3115 = vshrl.u32 %v3114, 7
        %v3116 = vsub.s32 %v2993, %v3115
        %v3117 = vrot.slane %v2926, %v3116
        %v3118 = vlaneseq
        %v3119 = vshrl.u32 %v3118, 7
        %v3120 = vsub.s32 %v2993, %v3119
        %v3121 = vrot.slane %v2927, %v3120
        %v3122 = vlaneseq
        %v3123 = vshrl.u32 %v3122, 7
        %v3124 = vsub.s32 %v2993, %v3123
        %v3125 = vrot.slane %v2928, %v3124
        %v3126 = vlaneseq
        %v3127 = vshrl.u32 %v3126, 7
        %v3128 = vsub.s32 %v2993, %v3127
        %v3129 = vrot.slane %v2929, %v3128
        %v3130 = vlaneseq
        %v3131 = vshrl.u32 %v3130, 7
        %v3132 = vsub.s32 %v2993, %v3131
        %v3133 = vrot.slane %v2930, %v3132
        %v3134 = vlaneseq
        %v3135 = vshrl.u32 %v3134, 7
        %v3136 = vsub.s32 %v2993, %v3135
        %v3137 = vrot.slane %v2931, %v3136
        %v3138 = vlaneseq
        %v3139 = vshrl.u32 %v3138, 7
        %v3140 = vsub.s32 %v2993, %v3139
        %v3141 = vrot.slane %v2932, %v3140
        %v3142 = vlaneseq
        %v3143 = vshrl.u32 %v3142, 7
        %v3144 = vsub.s32 %v2993, %v3143
        %v3145 = vrot.slane %v2933, %v3144
        %v3146 = vlaneseq
        %v3147 = vshrl.u32 %v3146, 7
        %v3148 = vsub.s32 %v2993, %v3147
        %v3149 = vrot.slane %v2934, %v3148
        %v3150 = vlaneseq
        %v3151 = vshrl.u32 %v3150, 7
        %v3152 = vsub.s32 %v2993, %v3151
        %v3153 = vrot.slane %v2935, %v3152
        %v3154 = vlaneseq
        %v3155 = vshrl.u32 %v3154, 7
        %v3156 = vsub.s32 %v2993, %v3155
        %v3157 = vrot.slane %v2936, %v3156
        %v3158 = vlaneseq
        %v3159 = vshrl.u32 %v3158, 7
        %v3160 = vsub.s32 %v2993, %v3159
        %v3161 = vrot.slane %v2937, %v3160
        %v3162 = vlaneseq
        %v3163 = vshrl.u32 %v3162, 7
        %v3164 = vsub.s32 %v2993, %v3163
        %v3165 = vrot.slane %v2938, %v3164
        %v3166 = vlaneseq
        %v3167 = vshrl.u32 %v3166, 7
        %v3168 = vsub.s32 %v2993, %v3167
        %v3169 = vrot.slane %v2939, %v3168
        %v3170 = vlaneseq
        %v3171 = vshrl.u32 %v3170, 7
        %v3172 = vsub.s32 %v2993, %v3171
        %v3173 = vrot.slane %v2940, %v3172
        %v3174 = vlaneseq
        %v3175 = vshrl.u32 %v3174, 7
        %v3176 = vsub.s32 %v2993, %v3175
        %v3177 = vrot.slane %v2941, %v3176
        %v3178 = vlaneseq
        %v3179 = vshrl.u32 %v3178, 7
        %v3180 = vsub.s32 %v2993, %v3179
        %v3181 = vrot.slane %v2942, %v3180
        %v3182 = vlaneseq
        %v3183 = vshrl.u32 %v3182, 7
        %v3184 = vsub.s32 %v2993, %v3183
        %v3185 = vrot.slane %v2943, %v3184
        %vm3186 = vcmask 1041409
        %v3187 = vsel %vm3186, %v3001, %v2997
        %vm3188 = vcmask 1042434
        %v3189 = vsel %vm3188, %v3005, %v3187
        %vm3190 = vcmask 1043459
        %v3191 = vsel %vm3190, %v3009, %v3189
        %vm3192 = vcmask 1044484
        %v3193 = vsel %vm3192, %v3013, %v3191
        %vm3194 = vcmask 1045509
        %v3195 = vsel %vm3194, %v3017, %v3193
        %vm3196 = vcmask 1046534
        %v3197 = vsel %vm3196, %v3021, %v3195
        %vm3198 = vcmask 1047559
        %v3199 = vsel %vm3198, %v3025, %v3197
        %v3200 = vsel %vm3186, %v3033, %v3029
        %v3201 = vsel %vm3188, %v3037, %v3200
        %v3202 = vsel %vm3190, %v3041, %v3201
        %v3203 = vsel %vm3192, %v3045, %v3202
        %v3204 = vsel %vm3194, %v3049, %v3203
        %v3205 = vsel %vm3196, %v3053, %v3204
        %v3206 = vsel %vm3198, %v3057, %v3205
        %v3207 = vsel %vm3186, %v3065, %v3061
        %v3208 = vsel %vm3188, %v3069, %v3207
        %v3209 = vsel %vm3190, %v3073, %v3208
        %v3210 = vsel %vm3192, %v3077, %v3209
        %v3211 = vsel %vm3194, %v3081, %v3210
        %v3212 = vsel %vm3196, %v3085, %v3211
        %v3213 = vsel %vm3198, %v3089, %v3212
        %v3214 = vsel %vm3186, %v3097, %v3093
        %v3215 = vsel %vm3188, %v3101, %v3214
        %v3216 = vsel %vm3190, %v3105, %v3215
        %v3217 = vsel %vm3192, %v3109, %v3216
        %v3218 = vsel %vm3194, %v3113, %v3217
        %v3219 = vsel %vm3196, %v3117, %v3218
        %v3220 = vsel %vm3198, %v3121, %v3219
        %v3221 = vsel %vm3186, %v3129, %v3125
        %v3222 = vsel %vm3188, %v3133, %v3221
        %v3223 = vsel %vm3190, %v3137, %v3222
        %v3224 = vsel %vm3192, %v3141, %v3223
        %v3225 = vsel %vm3194, %v3145, %v3224
        %v3226 = vsel %vm3196, %v3149, %v3225
        %v3227 = vsel %vm3198, %v3153, %v3226
        %v3228 = vsel %vm3186, %v3161, %v3157
        %v3229 = vsel %vm3188, %v3165, %v3228
        %v3230 = vsel %vm3190, %v3169, %v3229
        %v3231 = vsel %vm3192, %v3173, %v3230
        %v3232 = vsel %vm3194, %v3177, %v3231
        %v3233 = vsel %vm3196, %v3181, %v3232
        %v3234 = vsel %vm3198, %v3185, %v3233
        %v3241 = vsel %vm1587, %v3199, 0.0
        %3242 = vadd.xlane.f32.xlu0 %v3241
        %v3243 = vpop.xlane.xlu0 %3242
        %v3244 = vsel %vm1587, %v3206, 0.0
        %3245 = vadd.xlane.f32.xlu0 %v3244
        %v3246 = vpop.xlane.xlu0 %3245
        %v3247 = vsel %vm1587, %v3213, 0.0
        %3248 = vadd.xlane.f32.xlu0 %v3247
        %v3249 = vpop.xlane.xlu0 %3248
        %v3250 = vsel %vm1587, %v3220, 0.0
        %3251 = vadd.xlane.f32.xlu0 %v3250
        %v3252 = vpop.xlane.xlu0 %3251
        %v3253 = vsel %vm1587, %v3227, 0.0
        %3254 = vadd.xlane.f32.xlu0 %v3253
        %v3255 = vpop.xlane.xlu0 %3254
        %v3256 = vsel %vm1587, %v3234, 0.0
        %3257 = vadd.xlane.f32.xlu0 %v3256
        %v3258 = vpop.xlane.xlu0 %3257
        %v3259 = vadd.f32 %v3243, %v3246
        %v3260 = vadd.f32 %v3259, %v3249
        %v3261 = vadd.f32 %v3260, %v3252
        %v3262 = vadd.f32 %v3261, %v3255
        %v3263 = vadd.f32 %v3262, %v3258
        %v3264 = vrot.slane %v3263, 4
        %v3265 = vadd.f32 %v3263, %v3264
        %v3266 = vrot.slane %v3265, 2
        %v3267 = vadd.f32 %v3265, %v3266
        %v3268 = vrot.slane %v3267, 1
        %v3269 = vadd.f32 %v3267, %v3268
        %3270 = vst [vmem:[%s137] sm:$0xff] %v3269
        %s3271 = sand.u32 %s71, 1
        %s3272 = scalar_lea.sflag [#allocation3], %s3271
        %s3273 = sand.u32 %s71, 1
        %s3274 = smul.addr %s3273, 8
        %s3275 = scalar_lea.vmem [#allocation2], %s3274
        // Predicated region
        $region29: #{tpu_custom_call.1} parent=27 // pred_check
          %p3276 = pneg %p81
        $region30: #{tpu_custom_call.1} parent=27 // pred_check_branch
          %3278 = sbr.rel (%p3276) target = $region32
        $region31: #{tpu_custom_call.1} parent=27 // pred_region
          %s3280 = ssub.s32 128, 128
          %3281 = vsyncadd %s3272, %s3280
          %s3282 = smul.addr %s16, 128
          %s3283 = scalar_lea.hbm %s2, %s3282
          %s3285 = sshll.u32 %s3275, 4
          %s3286 = int_to_ptr.vmem [resolvable:$true] %s3285
          %3288 = dma.vmem_to_hbm [thread:$0]  %s3286, 128, %s3283, %s3272
        $region32: #{tpu_custom_call.1} parent=27 // pred_fallthru
          _
      $region28: #{tpu_custom_call.1} parent=5 // pred_fallthru
        _
      %p3289 = scmp.le.s32.totalorder 2, %s11
      // Predicated region
      $region33: #{tpu_custom_call.1} parent=5 // pred_check
        %p3290 = pneg %p3289
      $region34: #{tpu_custom_call.1} parent=5 // pred_check_branch
        %3292 = sbr.rel (%p3290) target = $region36
      $region35: #{tpu_custom_call.1} parent=5 // pred_region
        %s3293 = ssub.s32 %s11, 2
        // Predicated region
        $region37: #{tpu_custom_call.1} parent=35 // pred_check
          %p3294 = pneg %p87
        $region38: #{tpu_custom_call.1} parent=35 // pred_check_branch
          %3296 = sbr.rel (%p3294) target = $region40
        $region39: #{tpu_custom_call.1} parent=35 // pred_region
          %s3297 = sand.u32 %s72, 1
          %s3298 = scalar_lea.sflag [#allocation3], %s3297
          %s3299 = sand.u32 %s72, 1
          %s3300 = smul.addr %s3299, 8
          %s3301 = scalar_lea.vmem [#allocation2], %s3300
          %3302 = dma.done %s3298, 128
        $region40: #{tpu_custom_call.1} parent=35 // pred_fallthru
          _
      $region36: #{tpu_custom_call.1} parent=5 // pred_fallthru
        _
    $region6: #{tpu_custom_call.1} parent=1 // loop_footer
      %s15 = sadd.s32 1, %s11
    $region7: #{tpu_custom_call.1} parent=1 // loop_footer_branch
      %10 = sbr.rel target = $region3
    $region8: #{tpu_custom_call.1} parent=1 // loop_exit
      _
    %3303 = vsyncpa [#allocation3], 1
    %s3304 = scalar_lea.sflag [#allocation3], 1
    %3305 = vsyncpa %s3304, 1

</llo_original>
